<compile_context>
chip_gen: v7x
topology: tpu7x:2x2x1
jax: 0.10.0
libtpu: 0.0.40
codegen_flags: <defaults>
</compile_context>

<pallas_src>
import jax
import jax.numpy as jnp
from jax.experimental import pallas as pl
from jax.experimental.pallas import tpu as pltpu

_LANE = 128
_SUBLANE_F32 = 8
_SUBLANE_BF16 = 16
# Conservative per-grid-step VMEM budget: fits inside v7x's 32 MiB scoped default
# (64 MiB physical) with headroom for compiler scratch; trivially fine on v5e/v6e.
_VMEM_BUDGET = 12 * 1024 * 1024


def _round_up(x, m):
    return ((x + m - 1) // m) * m


def _pick_batch_tile(n, c, hw, fp, kp):
    """Size the per-step batch tile B from the VMEM budget (generation-aware).

    Per-sample cost = double-buffered bf16 x tile (tiny C pads to 16 sublanes, i.e.
    the 4x inflation the review flagged) + the f32 (HW, Fp) backbone intermediate
    (the dominant term) + double-buffered output rows.  Weights are single-buffered.
    """
    c_pad = _round_up(c, _SUBLANE_BF16)
    per_sample = (
        2 * c_pad * hw * 2          # double-buffered bf16 x tile incl. sublane pad
        + hw * fp * 4               # f32 (HW, Fp) conv intermediate (VMEM-resident)
        + 2 * (fp + kp) * 4         # double-buffered output rows
    )
    fixed = (c_pad * fp + fp * kp) * 2 + kp * 4   # single-buffered weights + bias
    b_max = max(
        _SUBLANE_F32,
        ((_VMEM_BUDGET - fixed) // per_sample) // _SUBLANE_F32 * _SUBLANE_F32,
    )

    b_single = _round_up(n, _SUBLANE_F32)
    if b_single <= max(_SUBLANE_F32, min(2 * _SUBLANE_F32, b_max)):
        # Small N: one full-sublane grid step beats several masked / tiny-DMA steps;
        # megacore sharding gains nothing at this size.
        return b_single
    # Large N: biggest tile that fits the budget, but keep >= 2 "parallel" grid
    # steps so both v7x TensorCores get work.
    return max(_SUBLANE_F32, min(b_max, _round_up(pl.cdiv(n, 2), _SUBLANE_F32)))


def _classifier_kernel(x_ref, wb_ref, wh_ref, bh_ref, pred_ref, feat_ref):
    # x_ref:    (B, C, HW)  bf16   batch tile, spatial flattened, HW on lanes
    # wb_ref:   (C, Fp)     bf16   1x1-conv ("backbone") weight, zero-padded to Fp
    # wh_ref:   (Fp, Kp)    bf16   head weight (transposed nn.Linear layout), padded
    # bh_ref:   (1, Kp)     f32    head bias, zero-padded
    # pred_ref: (B, Kp)            predictions tile
    # feat_ref: (B, Fp)            features tile
    B, C, _ = x_ref.shape
    Fp = wb_ref.shape[1]

    # Backbone 1x1 conv for the whole batch tile in ONE batched MXU contraction
    # (replaces the old per-sample unrolled loop + row concatenate).  wb is broadcast
    # over B so this is the explicitly-batched 'b..,b..->b..' matmul form Mosaic
    # lowers directly; the tiny C axis is contracted per sample, HW stays on
    # sublanes, the lane-dense Fp axis stays on lanes.  f32 accumulation.
    wb_b = jnp.broadcast_to(wb_ref[...][None, :, :], (B, C, Fp))
    h = jnp.einsum("bcs,bcf->bsf", x_ref[...], wb_b,
                   preferred_element_type=jnp.float32)          # (B, HW, Fp) f32
    h = jnp.maximum(h, 0.0)                                      # ReLU (backbone)

    # Bottleneck: AdaptiveAvgPool2d((1,1)) + Flatten == mean over spatial positions,
    # written straight into the feature output (sublane reduction per sample).
    f = jnp.mean(h, axis=1)                                      # (B, Fp) f32
    feat_ref[...] = f.astype(feat_ref.dtype)

    # Head: Linear(features_dim -> num_classes) with bias.  Features stay f32 and wh
    # is promoted from its bf16 storage, so predictions match the returned features
    # (review correctness note); the MXU has slack for an f32 pass here.
    p = jnp.dot(f, wh_ref[...].astype(jnp.float32),
                preferred_element_type=jnp.float32) + bh_ref[...]
    pred_ref[...] = p.astype(pred_ref.dtype)


def classifier_base_forward(x_nchw, wb, wh, bh, *, out_dtype=jnp.float32):
    """ClassifierBase.forward.

    x_nchw: (N, C, H, W) f32; wb: (C, F) 1x1-conv backbone weight; wh: (F, K) head
    weight (transposed nn.Linear layout); bh: (K,) head bias.
    Returns (predictions (N, K), features (N, F)) in `out_dtype` (default f32; pass
    bf16 if the consumer tolerates it to halve feature writeback — all in-kernel
    accumulation stays f32 either way).
    """
    N, C, H, W = x_nchw.shape
    HW = H * W
    F = wb.shape[1]
    K = wh.shape[1]
    Fp = _round_up(F, _LANE)
    Kp = _round_up(K, _LANE)

    # Batch tile from the VMEM budget; grid = Np // B.
    # TODO(synk): HW x Fp is kept whole per step (backbone final feature maps are
    # small); a very large spatial*feature product would need an HW-chunked inner loop.
    B = _pick_batch_tile(N, C, HW, Fp, Kp)
    Np = pl.cdiv(N, B) * B

    # NCHW -> (N, C, H*W): a free reshape (no transpose, no extra HBM pass); the long
    # HW axis lands on the lane dimension so every x load is lane-dense.  bf16 at the
    # boundary halves the dominant x HBM read (tightest roofline on v5e).
    x = x_nchw.reshape(N, C, HW)
    if Np != N:
        x = jnp.pad(x, ((0, Np - N), (0, 0), (0, 0)))
    x = x.astype(jnp.bfloat16)

    # Zero-pad F / K to lane multiples (128 only — deliberately NOT 256 for the
    # v6e/v7x MXU: the kernel is DMA / step-overhead bound, wider padding would just
    # double writeback).  Padded columns stay exactly zero through conv/relu/mean/head.
    wb_p = jnp.pad(wb.astype(jnp.bfloat16), ((0, 0), (0, Fp - F)))
    wh_p = jnp.pad(wh.astype(jnp.bfloat16), ((0, Fp - F), (0, Kp - K)))
    bh_p = jnp.pad(bh.astype(jnp.float32), (0, Kp - K)).reshape(1, Kp)

    # Grid-invariant operands (constant index_map): single-buffer them — the default
    # double buffer is pure VMEM waste for weights that never change across steps.
    invariant = pl.Buffered(1)

    preds, feats = pl.pallas_call(
        _classifier_kernel,
        out_shape=(
            jax.ShapeDtypeStruct((Np, Kp), out_dtype),
            jax.ShapeDtypeStruct((Np, Fp), out_dtype),
        ),
        grid_spec=pltpu.PrefetchScalarGridSpec(
            num_scalar_prefetch=0,
            grid=(Np // B,),
            in_specs=[
                pl.BlockSpec((B, C, HW), lambda i: (i, 0, 0)),
                pl.BlockSpec((C, Fp), lambda i: (0, 0), pipeline_mode=invariant),
                pl.BlockSpec((Fp, Kp), lambda i: (0, 0), pipeline_mode=invariant),
                pl.BlockSpec((1, Kp), lambda i: (0, 0), pipeline_mode=invariant),
            ],
            out_specs=[
                pl.BlockSpec((B, Kp), lambda i: (i, 0)),
                pl.BlockSpec((B, Fp), lambda i: (i, 0)),
            ],
        ),
        compiler_params=pltpu.CompilerParams(
            dimension_semantics=("parallel",),
            vmem_limit_bytes=32 * 1024 * 1024,
        ),
    )(x, wb_p, wh_p, bh_p)

    return preds[:N, :K], feats[:N, :F]


def _reference(x_nchw, wb, wh, bh):
    # Pure-JAX f32 reference of the same forward pass.
    h = jnp.einsum("nchw,cf->nfhw", x_nchw, wb)
    h = jnp.maximum(h, 0.0)
    f = jnp.mean(h, axis=(2, 3))          # (N, F)
    p = f @ wh + bh[None, :]              # (N, K)
    return p, f


if __name__ == "__main__":
    # Small, module-consistent shapes.
    N, C, H, W = 2, 4, 16, 16             # input (minibatch, C, H, W)
    out_features = 32                     # backbone.out_features == features_dim
    num_classes = 8

    key = jax.random.PRNGKey(0)
    k_x, k_wb, k_wh, k_bh = jax.random.split(key, 4)

    x = jax.random.normal(k_x, (N, C, H, W), dtype=jnp.float32)
    # TODO(synk): the original module takes an arbitrary user-supplied `backbone`;
    # a pointwise (1x1) conv + ReLU stand-in producing `out_features` channels is used.
    wb = jax.random.normal(k_wb, (C, out_features), dtype=jnp.float32) * 0.1
    # Head: nn.Linear(features_dim, num_classes, bias=True); stored transposed.
    wh = jax.random.normal(k_wh, (out_features, num_classes), dtype=jnp.float32) * 0.1
    bh = jax.random.normal(k_bh, (num_classes,), dtype=jnp.float32) * 0.1

    fwd = jax.jit(classifier_base_forward)
    preds, feats = fwd(x, wb, wh, bh)
    jax.block_until_ready((preds, feats))

    p_ref, f_ref = _reference(x, wb, wh, bh)
    assert preds.shape == (N, num_classes) and feats.shape == (N, out_features)
    # bf16 x/weights at the boundary with f32 accumulation: loosened tolerance.
    assert jnp.allclose(preds, p_ref, atol=2e-2, rtol=2e-2)
    assert jnp.allclose(feats, f_ref, atol=2e-2, rtol=2e-2)

    print("KERNEL_OK")
</pallas_src>

<mosaic_0001>
module attributes {stable_mosaic.version = 11 : i64} {
  func.func @_classifier_kernel(%arg0: i32, %arg1: memref<8x4x256xbf16, #tpu.memory_space<vmem>>, %arg2: memref<4x128xbf16, #tpu.memory_space<vmem>>, %arg3: memref<128x128xbf16, #tpu.memory_space<vmem>>, %arg4: memref<1x128xf32, #tpu.memory_space<vmem>>, %arg5: memref<8x128xf32, #tpu.memory_space<vmem>>, %arg6: memref<8x128xf32, #tpu.memory_space<vmem>>) attributes {dimension_semantics = [#tpu.dimension_semantics<parallel>], iteration_bounds = array<i64: 1>, scalar_prefetch = 0 : i64, scratch_operands = 0 : i64, tpu.core_type = #tpu.core_type<tc>, window_params = [{transform_indices = @transform_0, window_bounds = array<i64: 8, 4, 256>}, {pipeline_mode = #tpu.pipeline_mode<synchronous>, transform_indices = @transform_1, window_bounds = array<i64: 4, 128>}, {pipeline_mode = #tpu.pipeline_mode<synchronous>, transform_indices = @transform_2, window_bounds = array<i64: 128, 128>}, {pipeline_mode = #tpu.pipeline_mode<synchronous>, transform_indices = @transform_3, window_bounds = array<i64: 1, 128>}, {transform_indices = @transform_4, window_bounds = array<i64: 8, 128>}, {transform_indices = @transform_5, window_bounds = array<i64: 8, 128>}]} {
    %c0 = arith.constant 0 : index
    %c0_0 = arith.constant 0 : index
    %0 = vector.load %arg2[%c0, %c0_0] : memref<4x128xbf16, #tpu.memory_space<vmem>>, vector<4x128xbf16>
    %1 = vector.shape_cast %0 : vector<4x128xbf16> to vector<1x4x128xbf16>
    %2 = vector.shape_cast %1 : vector<1x4x128xbf16> to vector<1x4x128xbf16>
    %3 = vector.broadcast %2 : vector<1x4x128xbf16> to vector<8x4x128xbf16>
    %c0_1 = arith.constant 0 : index
    %c0_2 = arith.constant 0 : index
    %c0_3 = arith.constant 0 : index
    %4 = vector.load %arg1[%c0_1, %c0_2, %c0_3] : memref<8x4x256xbf16, #tpu.memory_space<vmem>>, vector<8x4x256xbf16>
    "tpu.trace_start"() <{level = 10 : i32, message = "bcs,bcf->bsf"}> : () -> ()
    %cst = arith.constant dense<0.000000e+00> : vector<8x256x128xf32>
    %5 = tpu.matmul %4, %3, %cst {dimension_numbers = #tpu.dot_dimension_numbers<[1], [1], [2], [2], [0, 0, 0, 2, 1, 2], [0], [0]>} : vector<8x4x256xbf16>, vector<8x4x128xbf16>, vector<8x256x128xf32> -> vector<8x256x128xf32>
    "tpu.trace_stop"() : () -> ()
    %cst_4 = arith.constant 0.000000e+00 : f32
    %6 = vector.broadcast %cst_4 : f32 to vector<8x256x128xf32>
    %7 = arith.maximumf %5, %6 : vector<8x256x128xf32>
    %cst_5 = arith.constant dense<0.000000e+00> : vector<8x128xf32>
    %8 = vector.multi_reduction <add>, %7, %cst_5 [1] : vector<8x256x128xf32> to vector<8x128xf32>
    %cst_6 = arith.constant 2.560000e+02 : f32
    %9 = vector.broadcast %cst_6 : f32 to vector<8x128xf32>
    %10 = arith.divf %8, %9 : vector<8x128xf32>
    %c0_7 = arith.constant 0 : index
    %c0_8 = arith.constant 0 : index
    %11 = vector.load %arg6[%c0_7, %c0_8] : memref<8x128xf32, #tpu.memory_space<vmem>>, vector<8x128xf32>
    tpu.vector_store %arg6[%c0_7, %c0_8], %10 {strides = array<i32>} : memref<8x128xf32, #tpu.memory_space<vmem>>, vector<8x128xf32>,
    %c0_9 = arith.constant 0 : index
    %c0_10 = arith.constant 0 : index
    %12 = vector.load %arg3[%c0_9, %c0_10] : memref<128x128xbf16, #tpu.memory_space<vmem>>, vector<128x128xbf16>
    %13 = arith.extf %12 : vector<128x128xbf16> to vector<128x128xf32>
    %cst_11 = arith.constant dense<0.000000e+00> : vector<8x128xf32>
    %14 = tpu.matmul %10, %13, %cst_11 {dimension_numbers = #tpu.dot_dimension_numbers<[1], [0], [0], [1], [0, 0, 1, 1], [], []>} : vector<8x128xf32>, vector<128x128xf32>, vector<8x128xf32> -> vector<8x128xf32>
    %c0_12 = arith.constant 0 : index
    %c0_13 = arith.constant 0 : index
    %15 = vector.load %arg4[%c0_12, %c0_13] : memref<1x128xf32, #tpu.memory_space<vmem>>, vector<1x128xf32>
    %16 = vector.broadcast %15 : vector<1x128xf32> to vector<8x128xf32>
    %17 = arith.addf %14, %16 : vector<8x128xf32>
    %c0_14 = arith.constant 0 : index
    %c0_15 = arith.constant 0 : index
    %18 = vector.load %arg5[%c0_14, %c0_15] : memref<8x128xf32, #tpu.memory_space<vmem>>, vector<8x128xf32>
    tpu.vector_store %arg5[%c0_14, %c0_15], %17 {strides = array<i32>} : memref<8x128xf32, #tpu.memory_space<vmem>>, vector<8x128xf32>,
    return
  }
  func.func @transform_0(%arg0: i32) -> (i32, i32, i32) {
    %c0_i32 = arith.constant 0 : i32
    %c0_i32_0 = arith.constant 0 : i32
    %c0_i32_1 = arith.constant 0 : i32
    return %arg0, %c0_i32, %c0_i32_0 : i32, i32, i32
  }
  func.func @transform_1(%arg0: i32) -> (i32, i32) {
    %c0_i32 = arith.constant 0 : i32
    %c0_i32_0 = arith.constant 0 : i32
    %c0_i32_1 = arith.constant 0 : i32
    return %c0_i32, %c0_i32_0 : i32, i32
  }
  func.func @transform_2(%arg0: i32) -> (i32, i32) {
    %c0_i32 = arith.constant 0 : i32
    %c0_i32_0 = arith.constant 0 : i32
    %c0_i32_1 = arith.constant 0 : i32
    return %c0_i32, %c0_i32_0 : i32, i32
  }
  func.func @transform_3(%arg0: i32) -> (i32, i32) {
    %c0_i32 = arith.constant 0 : i32
    %c0_i32_0 = arith.constant 0 : i32
    %c0_i32_1 = arith.constant 0 : i32
    return %c0_i32, %c0_i32_0 : i32, i32
  }
  func.func @transform_4(%arg0: i32) -> (i32, i32) {
    %c0_i32 = arith.constant 0 : i32
    %c0_i32_0 = arith.constant 0 : i32
    return %arg0, %c0_i32 : i32, i32
  }
  func.func @transform_5(%arg0: i32) -> (i32, i32) {
    %c0_i32 = arith.constant 0 : i32
    %c0_i32_0 = arith.constant 0 : i32
    return %arg0, %c0_i32 : i32, i32
  }
}

</mosaic_0001>

<llo_original>
// kernel: classifier_base_forward.1
$region0: #{classifier_base_forward.1}
  #allocation0 [shape = 'u32[]', space=smem, size = 0x4, offset = 0x4, fixed_abs, tag = 'smem constant byte address 0x4 - core index']
  #allocation1 [shape = 'u32[144,128]{1,0:T(1,128)}', space=vmem, size = 0x12000, scoped, tag = 'internal scratch']
  %s0 = inlined_call_operand.vmem [shape: bf16[8,4,256], index: 0, kind: input, shape index: {}]
  %s1 = inlined_call_operand.vmem [shape: bf16[4,128], index: 1, kind: input, shape index: {}]
  %s2 = inlined_call_operand.vmem [shape: bf16[128,128], index: 2, kind: input, shape index: {}]
  %s3 = inlined_call_operand.vmem [shape: f32[1,128], index: 3, kind: input, shape index: {}]
  %s4 = inlined_call_operand.vmem [shape: f32[8,128], index: 4, kind: output, shape index: {0}]
  %s5 = inlined_call_operand.vmem [shape: f32[8,128], index: 5, kind: output, shape index: {1}]
  %6 = xla_tuple %s4, %s5
  %s7 = sld [smem:[#allocation0]]
  $region34: #{classifier_base_forward.1} parent=0
    _
  %s9 = ssub.s32 1, %s7
  %s10 = scalar_select 0, %s9, %s7
  // Predicated region
  $region2: #{classifier_base_forward.1} parent=0 // pred_check
    _
  $region3: #{classifier_base_forward.1} parent=0 // pred_check_branch
    %12 = sbr.rel (0) target = $region5
  $region4: #{classifier_base_forward.1} parent=0 // pred_region
    _
  $region5: #{classifier_base_forward.1} parent=0 // pred_fallthru
    _
  // Predicated region
  $region6: #{classifier_base_forward.1} parent=0 // pred_check
    _
  $region7: #{classifier_base_forward.1} parent=0 // pred_check_branch
    %14 = sbr.rel (0) target = $region9
  $region8: #{classifier_base_forward.1} parent=0 // pred_region
    _
  $region9: #{classifier_base_forward.1} parent=0 // pred_fallthru
    _
  // Predicated region
  $region10: #{classifier_base_forward.1} parent=0 // pred_check
    _
  $region11: #{classifier_base_forward.1} parent=0 // pred_check_branch
    %16 = sbr.rel (0) target = $region13
  $region12: #{classifier_base_forward.1} parent=0 // pred_region
    _
  $region13: #{classifier_base_forward.1} parent=0 // pred_fallthru
    _
  // Predicated region
  $region14: #{classifier_base_forward.1} parent=0 // pred_check
    _
  $region15: #{classifier_base_forward.1} parent=0 // pred_check_branch
    %18 = sbr.rel (0) target = $region17
  $region16: #{classifier_base_forward.1} parent=0 // pred_region
    _
  $region17: #{classifier_base_forward.1} parent=0 // pred_fallthru
    _
  %v20 = vld [vmem:[%s1] sm:$0x3]
  %v21 = vld [vmem:[%s0] sm:$0xf]
  %v22 = vld [vmem:[%s0 + $0x4] sm:$0xf]
  %v23 = vld [vmem:[%s0 + $0x8] sm:$0xf]
  %v24 = vld [vmem:[%s0 + $0xc] sm:$0xf]
  %v25 = vld [vmem:[%s0 + $0x10] sm:$0xf]
  %v26 = vld [vmem:[%s0 + $0x14] sm:$0xf]
  %v27 = vld [vmem:[%s0 + $0x18] sm:$0xf]
  %v28 = vld [vmem:[%s0 + $0x1c] sm:$0xf]
  %v31 = vunpack.c.l.s4 1983009808
  %v32 = vunpack.c.0.s8 %v31
  %v33 = vlaneseq
  %v34 = vshrl.u32 %v33, 7
  %v35 = vsub.s32 %v32, %v34
  %v36 = vrot.slane %v21, %v35
  %v37 = vcombine.high %v36, %v36
  %40 = vxpose.xlu0.c.b16.start [1/8] %v36, 128
  %41 = vxpose.xlu0.c.b16.cont [2/8] 0, 128
  %42 = vxpose.xlu0.c.b16.cont [3/8] 0, 128
  %43 = vxpose.xlu0.c.b16.cont [4/8] 0, 128
  %44 = vxpose.xlu0.c.b16.cont [5/8] 0, 128
  %45 = vxpose.xlu0.c.b16.cont [6/8] 0, 128
  %46 = vxpose.xlu0.c.b16.cont [7/8] 0, 128
  %47 = vxpose.xlu0.c.b16.end [8/8] 0, 128
  %v48 = vpop.trf.xlu0
  %v49 = vpop.trf.xlu0
  %v50 = vpop.trf.xlu0
  %v51 = vpop.trf.xlu0
  %v52 = vpop.trf.xlu0
  %v53 = vpop.trf.xlu0
  %v54 = vpop.trf.xlu0
  %v55 = vpop.trf.xlu0
  %56 = vxpose.xlu0.c.b16.start [1/8] %v37, 128
  %57 = vxpose.xlu0.c.b16.cont [2/8] 0, 128
  %58 = vxpose.xlu0.c.b16.cont [3/8] 0, 128
  %59 = vxpose.xlu0.c.b16.cont [4/8] 0, 128
  %60 = vxpose.xlu0.c.b16.cont [5/8] 0, 128
  %61 = vxpose.xlu0.c.b16.cont [6/8] 0, 128
  %62 = vxpose.xlu0.c.b16.cont [7/8] 0, 128
  %63 = vxpose.xlu0.c.b16.end [8/8] 0, 128
  %v64 = vpop.trf.xlu0
  %v65 = vpop.trf.xlu0
  %v66 = vpop.trf.xlu0
  %v67 = vpop.trf.xlu0
  %v68 = vpop.trf.xlu0
  %v69 = vpop.trf.xlu0
  %v70 = vpop.trf.xlu0
  %v71 = vpop.trf.xlu0
  %vm72 = vcmask 31744
  %v74 = vsel %vm72, %v48, 0
  %v77 = vsel %vm72, %v49, 0
  %v80 = vsel %vm72, %v50, 0
  %v83 = vsel %vm72, %v51, 0
  %v86 = vsel %vm72, %v52, 0
  %v89 = vsel %vm72, %v53, 0
  %v92 = vsel %vm72, %v54, 0
  %v95 = vsel %vm72, %v55, 0
  %v98 = vsel %vm72, %v64, 0
  %v101 = vsel %vm72, %v65, 0
  %v104 = vsel %vm72, %v66, 0
  %v107 = vsel %vm72, %v67, 0
  %v110 = vsel %vm72, %v68, 0
  %v113 = vsel %vm72, %v69, 0
  %v116 = vsel %vm72, %v70, 0
  %v119 = vsel %vm72, %v71, 0
  %vm121 = vcmask 1041408
  %v123 = vsel %vm121, %v20, 0
  %125 = vmatprep.subr.bf16.mxu0 0
  %126 = vmatpush1.bf16.msra.mxu0 %v123
  %127 = vmatprep.subr.bf16.mxu0 0
  %128 = vmatpush1.bf16.msra.mxu0 0
  %129 = vmatprep.subr.bf16.mxu0 0
  %130 = vmatpush1.bf16.msra.mxu0 0
  %131 = vmatprep.subr.bf16.mxu0 0
  %132 = vmatpush1.bf16.msra.mxu0 0
  %133 = vmatprep.subr.bf16.mxu0 0
  %134 = vmatpush1.bf16.msra.mxu0 0
  %135 = vmatprep.subr.bf16.mxu0 0
  %136 = vmatpush1.bf16.msra.mxu0 0
  %137 = vmatprep.subr.bf16.mxu0 0
  %138 = vmatpush1.bf16.msra.mxu0 0
  %139 = vmatprep.subr.bf16.mxu0 0
  %140 = vmatpush1.bf16.msra.mxu0 0
  %141 = vmatprep.subr.bf16.mxu0 0
  %142 = vmatpush1.bf16.msra.mxu0 0
  %143 = vmatprep.subr.bf16.mxu0 0
  %144 = vmatpush1.bf16.msra.mxu0 0
  %145 = vmatprep.subr.bf16.mxu0 0
  %146 = vmatpush1.bf16.msra.mxu0 0
  %147 = vmatprep.subr.bf16.mxu0 0
  %148 = vmatpush1.bf16.msra.mxu0 0
  %149 = vmatprep.subr.bf16.mxu0 0
  %150 = vmatpush1.bf16.msra.mxu0 0
  %151 = vmatprep.subr.bf16.mxu0 0
  %152 = vmatpush1.bf16.msra.mxu0 0
  %153 = vmatprep.subr.bf16.mxu0 0
  %154 = vmatpush1.bf16.msra.mxu0 0
  %155 = vmatprep.subr.bf16.mxu0 0
  %156 = vmatpush1.bf16.msra.mxu0 0
  %157 = vmatprep.mubr.bf16.mxu0 0
  %158 = vmatmul.mubr.bf16.gmra.mrb[0].mxu0 %v74
  %v159 = vpop.f32.mrb[0].mxu0
  %v160 = vadd.f32 0.0, %v159
  %v161 = vpop.f32.mrb[0].mxu0
  %v162 = vpop.f32.mrb[0].mxu0
  %v163 = vadd.f32 0.0, %v162
  %v164 = vpop.f32.mrb[0].mxu0
  %165 = vmatprep.mubr.bf16.mxu0 0
  %166 = vmatmul.mubr.bf16.gmra.mrb[0].mxu0 %v77
  %v167 = vpop.f32.mrb[0].mxu0
  %v168 = vadd.f32 0.0, %v167
  %v169 = vpop.f32.mrb[0].mxu0
  %v170 = vpop.f32.mrb[0].mxu0
  %v171 = vadd.f32 0.0, %v170
  %v172 = vpop.f32.mrb[0].mxu0
  %173 = vmatprep.mubr.bf16.mxu0 0
  %174 = vmatmul.mubr.bf16.gmra.mrb[0].mxu0 %v80
  %v175 = vpop.f32.mrb[0].mxu0
  %v176 = vadd.f32 0.0, %v175
  %v177 = vpop.f32.mrb[0].mxu0
  %v178 = vpop.f32.mrb[0].mxu0
  %v179 = vadd.f32 0.0, %v178
  %v180 = vpop.f32.mrb[0].mxu0
  %181 = vmatprep.mubr.bf16.mxu0 0
  %182 = vmatmul.mubr.bf16.gmra.mrb[0].mxu0 %v83
  %v183 = vpop.f32.mrb[0].mxu0
  %v184 = vadd.f32 0.0, %v183
  %v185 = vpop.f32.mrb[0].mxu0
  %v186 = vpop.f32.mrb[0].mxu0
  %v187 = vadd.f32 0.0, %v186
  %v188 = vpop.f32.mrb[0].mxu0
  %189 = vmatprep.mubr.bf16.mxu0 0
  %190 = vmatmul.mubr.bf16.gmra.mrb[0].mxu0 %v86
  %v191 = vpop.f32.mrb[0].mxu0
  %v192 = vadd.f32 0.0, %v191
  %v193 = vpop.f32.mrb[0].mxu0
  %v194 = vpop.f32.mrb[0].mxu0
  %v195 = vadd.f32 0.0, %v194
  %v196 = vpop.f32.mrb[0].mxu0
  %197 = vmatprep.mubr.bf16.mxu0 0
  %198 = vmatmul.mubr.bf16.gmra.mrb[0].mxu0 %v89
  %v199 = vpop.f32.mrb[0].mxu0
  %v200 = vadd.f32 0.0, %v199
  %v201 = vpop.f32.mrb[0].mxu0
  %v202 = vpop.f32.mrb[0].mxu0
  %v203 = vadd.f32 0.0, %v202
  %v204 = vpop.f32.mrb[0].mxu0
  %205 = vmatprep.mubr.bf16.mxu0 0
  %206 = vmatmul.mubr.bf16.gmra.mrb[0].mxu0 %v92
  %v207 = vpop.f32.mrb[0].mxu0
  %v208 = vadd.f32 0.0, %v207
  %v209 = vpop.f32.mrb[0].mxu0
  %v210 = vpop.f32.mrb[0].mxu0
  %v211 = vadd.f32 0.0, %v210
  %v212 = vpop.f32.mrb[0].mxu0
  %213 = vmatprep.mubr.bf16.mxu0 0
  %214 = vmatmul.mubr.bf16.gmra.mrb[0].mxu0 %v95
  %v215 = vpop.f32.mrb[0].mxu0
  %v216 = vadd.f32 0.0, %v215
  %v217 = vpop.f32.mrb[0].mxu0
  %v218 = vpop.f32.mrb[0].mxu0
  %v219 = vadd.f32 0.0, %v218
  %v220 = vpop.f32.mrb[0].mxu0
  %221 = vmatprep.mubr.bf16.mxu0 0
  %222 = vmatmul.mubr.bf16.gmra.mrb[0].mxu0 %v98
  %v223 = vpop.f32.mrb[0].mxu0
  %v224 = vadd.f32 0.0, %v223
  %v225 = vpop.f32.mrb[0].mxu0
  %v226 = vpop.f32.mrb[0].mxu0
  %v227 = vadd.f32 0.0, %v226
  %v228 = vpop.f32.mrb[0].mxu0
  %229 = vmatprep.mubr.bf16.mxu0 0
  %230 = vmatmul.mubr.bf16.gmra.mrb[0].mxu0 %v101
  %v231 = vpop.f32.mrb[0].mxu0
  %v232 = vadd.f32 0.0, %v231
  %v233 = vpop.f32.mrb[0].mxu0
  %v234 = vpop.f32.mrb[0].mxu0
  %v235 = vadd.f32 0.0, %v234
  %v236 = vpop.f32.mrb[0].mxu0
  %237 = vmatprep.mubr.bf16.mxu0 0
  %238 = vmatmul.mubr.bf16.gmra.mrb[0].mxu0 %v104
  %v239 = vpop.f32.mrb[0].mxu0
  %v240 = vadd.f32 0.0, %v239
  %v241 = vpop.f32.mrb[0].mxu0
  %v242 = vpop.f32.mrb[0].mxu0
  %v243 = vadd.f32 0.0, %v242
  %v244 = vpop.f32.mrb[0].mxu0
  %245 = vmatprep.mubr.bf16.mxu0 0
  %246 = vmatmul.mubr.bf16.gmra.mrb[0].mxu0 %v107
  %v247 = vpop.f32.mrb[0].mxu0
  %v248 = vadd.f32 0.0, %v247
  %v249 = vpop.f32.mrb[0].mxu0
  %v250 = vpop.f32.mrb[0].mxu0
  %v251 = vadd.f32 0.0, %v250
  %v252 = vpop.f32.mrb[0].mxu0
  %253 = vmatprep.mubr.bf16.mxu0 0
  %254 = vmatmul.mubr.bf16.gmra.mrb[0].mxu0 %v110
  %v255 = vpop.f32.mrb[0].mxu0
  %v256 = vadd.f32 0.0, %v255
  %v257 = vpop.f32.mrb[0].mxu0
  %v258 = vpop.f32.mrb[0].mxu0
  %v259 = vadd.f32 0.0, %v258
  %v260 = vpop.f32.mrb[0].mxu0
  %261 = vmatprep.mubr.bf16.mxu0 0
  %262 = vmatmul.mubr.bf16.gmra.mrb[0].mxu0 %v113
  %v263 = vpop.f32.mrb[0].mxu0
  %v264 = vadd.f32 0.0, %v263
  %v265 = vpop.f32.mrb[0].mxu0
  %v266 = vpop.f32.mrb[0].mxu0
  %v267 = vadd.f32 0.0, %v266
  %v268 = vpop.f32.mrb[0].mxu0
  %269 = vmatprep.mubr.bf16.mxu0 0
  %270 = vmatmul.mubr.bf16.gmra.mrb[0].mxu0 %v116
  %v271 = vpop.f32.mrb[0].mxu0
  %v272 = vadd.f32 0.0, %v271
  %v273 = vpop.f32.mrb[0].mxu0
  %v274 = vpop.f32.mrb[0].mxu0
  %v275 = vadd.f32 0.0, %v274
  %v276 = vpop.f32.mrb[0].mxu0
  %277 = vmatprep.mubr.bf16.mxu0 0
  %278 = vmatmul.mubr.bf16.gmra.mrb[0].mxu0 %v119
  %v279 = vpop.f32.mrb[0].mxu0
  %v280 = vadd.f32 0.0, %v279
  %v281 = vpop.f32.mrb[0].mxu0
  %v282 = vpop.f32.mrb[0].mxu0
  %v283 = vadd.f32 0.0, %v282
  %v284 = vpop.f32.mrb[0].mxu0
  %285 = vdwg.mxu0
  %v288 = vunpack.c.l.s4 1983009808
  %v289 = vunpack.c.0.s8 %v288
  %v290 = vlaneseq
  %v291 = vshrl.u32 %v290, 7
  %v292 = vsub.s32 %v289, %v291
  %v293 = vrot.slane %v22, %v292
  %v294 = vcombine.high %v293, %v293
  %297 = vxpose.xlu0.c.b16.start [1/8] %v293, 128
  %298 = vxpose.xlu0.c.b16.cont [2/8] 0, 128
  %299 = vxpose.xlu0.c.b16.cont [3/8] 0, 128
  %300 = vxpose.xlu0.c.b16.cont [4/8] 0, 128
  %301 = vxpose.xlu0.c.b16.cont [5/8] 0, 128
  %302 = vxpose.xlu0.c.b16.cont [6/8] 0, 128
  %303 = vxpose.xlu0.c.b16.cont [7/8] 0, 128
  %304 = vxpose.xlu0.c.b16.end [8/8] 0, 128
  %v305 = vpop.trf.xlu0
  %v306 = vpop.trf.xlu0
  %v307 = vpop.trf.xlu0
  %v308 = vpop.trf.xlu0
  %v309 = vpop.trf.xlu0
  %v310 = vpop.trf.xlu0
  %v311 = vpop.trf.xlu0
  %v312 = vpop.trf.xlu0
  %313 = vxpose.xlu0.c.b16.start [1/8] %v294, 128
  %314 = vxpose.xlu0.c.b16.cont [2/8] 0, 128
  %315 = vxpose.xlu0.c.b16.cont [3/8] 0, 128
  %316 = vxpose.xlu0.c.b16.cont [4/8] 0, 128
  %317 = vxpose.xlu0.c.b16.cont [5/8] 0, 128
  %318 = vxpose.xlu0.c.b16.cont [6/8] 0, 128
  %319 = vxpose.xlu0.c.b16.cont [7/8] 0, 128
  %320 = vxpose.xlu0.c.b16.end [8/8] 0, 128
  %v321 = vpop.trf.xlu0
  %v322 = vpop.trf.xlu0
  %v323 = vpop.trf.xlu0
  %v324 = vpop.trf.xlu0
  %v325 = vpop.trf.xlu0
  %v326 = vpop.trf.xlu0
  %v327 = vpop.trf.xlu0
  %v328 = vpop.trf.xlu0
  %v330 = vsel %vm72, %v305, 0
  %v333 = vsel %vm72, %v306, 0
  %v336 = vsel %vm72, %v307, 0
  %v339 = vsel %vm72, %v308, 0
  %v342 = vsel %vm72, %v309, 0
  %v345 = vsel %vm72, %v310, 0
  %v348 = vsel %vm72, %v311, 0
  %v351 = vsel %vm72, %v312, 0
  %v354 = vsel %vm72, %v321, 0
  %v357 = vsel %vm72, %v322, 0
  %v360 = vsel %vm72, %v323, 0
  %v363 = vsel %vm72, %v324, 0
  %v366 = vsel %vm72, %v325, 0
  %v369 = vsel %vm72, %v326, 0
  %v372 = vsel %vm72, %v327, 0
  %v375 = vsel %vm72, %v328, 0
  %377 = vmatprep.subr.bf16.mxu0 0
  %378 = vmatpush1.bf16.msra.mxu0 %v123
  %379 = vmatprep.subr.bf16.mxu0 0
  %380 = vmatpush1.bf16.msra.mxu0 0
  %381 = vmatprep.subr.bf16.mxu0 0
  %382 = vmatpush1.bf16.msra.mxu0 0
  %383 = vmatprep.subr.bf16.mxu0 0
  %384 = vmatpush1.bf16.msra.mxu0 0
  %385 = vmatprep.subr.bf16.mxu0 0
  %386 = vmatpush1.bf16.msra.mxu0 0
  %387 = vmatprep.subr.bf16.mxu0 0
  %388 = vmatpush1.bf16.msra.mxu0 0
  %389 = vmatprep.subr.bf16.mxu0 0
  %390 = vmatpush1.bf16.msra.mxu0 0
  %391 = vmatprep.subr.bf16.mxu0 0
  %392 = vmatpush1.bf16.msra.mxu0 0
  %393 = vmatprep.subr.bf16.mxu0 0
  %394 = vmatpush1.bf16.msra.mxu0 0
  %395 = vmatprep.subr.bf16.mxu0 0
  %396 = vmatpush1.bf16.msra.mxu0 0
  %397 = vmatprep.subr.bf16.mxu0 0
  %398 = vmatpush1.bf16.msra.mxu0 0
  %399 = vmatprep.subr.bf16.mxu0 0
  %400 = vmatpush1.bf16.msra.mxu0 0
  %401 = vmatprep.subr.bf16.mxu0 0
  %402 = vmatpush1.bf16.msra.mxu0 0
  %403 = vmatprep.subr.bf16.mxu0 0
  %404 = vmatpush1.bf16.msra.mxu0 0
  %405 = vmatprep.subr.bf16.mxu0 0
  %406 = vmatpush1.bf16.msra.mxu0 0
  %407 = vmatprep.subr.bf16.mxu0 0
  %408 = vmatpush1.bf16.msra.mxu0 0
  %409 = vmatprep.mubr.bf16.mxu0 0
  %410 = vmatmul.mubr.bf16.gmra.mrb[0].mxu0 %v330
  %v411 = vpop.f32.mrb[0].mxu0
  %v412 = vadd.f32 0.0, %v411
  %v413 = vpop.f32.mrb[0].mxu0
  %v414 = vpop.f32.mrb[0].mxu0
  %v415 = vadd.f32 0.0, %v414
  %v416 = vpop.f32.mrb[0].mxu0
  %417 = vmatprep.mubr.bf16.mxu0 0
  %418 = vmatmul.mubr.bf16.gmra.mrb[0].mxu0 %v333
  %v419 = vpop.f32.mrb[0].mxu0
  %v420 = vadd.f32 0.0, %v419
  %v421 = vpop.f32.mrb[0].mxu0
  %v422 = vpop.f32.mrb[0].mxu0
  %v423 = vadd.f32 0.0, %v422
  %v424 = vpop.f32.mrb[0].mxu0
  %425 = vmatprep.mubr.bf16.mxu0 0
  %426 = vmatmul.mubr.bf16.gmra.mrb[0].mxu0 %v336
  %v427 = vpop.f32.mrb[0].mxu0
  %v428 = vadd.f32 0.0, %v427
  %v429 = vpop.f32.mrb[0].mxu0
  %v430 = vpop.f32.mrb[0].mxu0
  %v431 = vadd.f32 0.0, %v430
  %v432 = vpop.f32.mrb[0].mxu0
  %433 = vmatprep.mubr.bf16.mxu0 0
  %434 = vmatmul.mubr.bf16.gmra.mrb[0].mxu0 %v339
  %v435 = vpop.f32.mrb[0].mxu0
  %v436 = vadd.f32 0.0, %v435
  %v437 = vpop.f32.mrb[0].mxu0
  %v438 = vpop.f32.mrb[0].mxu0
  %v439 = vadd.f32 0.0, %v438
  %v440 = vpop.f32.mrb[0].mxu0
  %441 = vmatprep.mubr.bf16.mxu0 0
  %442 = vmatmul.mubr.bf16.gmra.mrb[0].mxu0 %v342
  %v443 = vpop.f32.mrb[0].mxu0
  %v444 = vadd.f32 0.0, %v443
  %v445 = vpop.f32.mrb[0].mxu0
  %v446 = vpop.f32.mrb[0].mxu0
  %v447 = vadd.f32 0.0, %v446
  %v448 = vpop.f32.mrb[0].mxu0
  %449 = vmatprep.mubr.bf16.mxu0 0
  %450 = vmatmul.mubr.bf16.gmra.mrb[0].mxu0 %v345
  %v451 = vpop.f32.mrb[0].mxu0
  %v452 = vadd.f32 0.0, %v451
  %v453 = vpop.f32.mrb[0].mxu0
  %v454 = vpop.f32.mrb[0].mxu0
  %v455 = vadd.f32 0.0, %v454
  %v456 = vpop.f32.mrb[0].mxu0
  %457 = vmatprep.mubr.bf16.mxu0 0
  %458 = vmatmul.mubr.bf16.gmra.mrb[0].mxu0 %v348
  %v459 = vpop.f32.mrb[0].mxu0
  %v460 = vadd.f32 0.0, %v459
  %v461 = vpop.f32.mrb[0].mxu0
  %v462 = vpop.f32.mrb[0].mxu0
  %v463 = vadd.f32 0.0, %v462
  %v464 = vpop.f32.mrb[0].mxu0
  %465 = vmatprep.mubr.bf16.mxu0 0
  %466 = vmatmul.mubr.bf16.gmra.mrb[0].mxu0 %v351
  %v467 = vpop.f32.mrb[0].mxu0
  %v468 = vadd.f32 0.0, %v467
  %v469 = vpop.f32.mrb[0].mxu0
  %v470 = vpop.f32.mrb[0].mxu0
  %v471 = vadd.f32 0.0, %v470
  %v472 = vpop.f32.mrb[0].mxu0
  %473 = vmatprep.mubr.bf16.mxu0 0
  %474 = vmatmul.mubr.bf16.gmra.mrb[0].mxu0 %v354
  %v475 = vpop.f32.mrb[0].mxu0
  %v476 = vadd.f32 0.0, %v475
  %v477 = vpop.f32.mrb[0].mxu0
  %v478 = vpop.f32.mrb[0].mxu0
  %v479 = vadd.f32 0.0, %v478
  %v480 = vpop.f32.mrb[0].mxu0
  %481 = vmatprep.mubr.bf16.mxu0 0
  %482 = vmatmul.mubr.bf16.gmra.mrb[0].mxu0 %v357
  %v483 = vpop.f32.mrb[0].mxu0
  %v484 = vadd.f32 0.0, %v483
  %v485 = vpop.f32.mrb[0].mxu0
  %v486 = vpop.f32.mrb[0].mxu0
  %v487 = vadd.f32 0.0, %v486
  %v488 = vpop.f32.mrb[0].mxu0
  %489 = vmatprep.mubr.bf16.mxu0 0
  %490 = vmatmul.mubr.bf16.gmra.mrb[0].mxu0 %v360
  %v491 = vpop.f32.mrb[0].mxu0
  %v492 = vadd.f32 0.0, %v491
  %v493 = vpop.f32.mrb[0].mxu0
  %v494 = vpop.f32.mrb[0].mxu0
  %v495 = vadd.f32 0.0, %v494
  %v496 = vpop.f32.mrb[0].mxu0
  %497 = vmatprep.mubr.bf16.mxu0 0
  %498 = vmatmul.mubr.bf16.gmra.mrb[0].mxu0 %v363
  %v499 = vpop.f32.mrb[0].mxu0
  %v500 = vadd.f32 0.0, %v499
  %v501 = vpop.f32.mrb[0].mxu0
  %v502 = vpop.f32.mrb[0].mxu0
  %v503 = vadd.f32 0.0, %v502
  %v504 = vpop.f32.mrb[0].mxu0
  %505 = vmatprep.mubr.bf16.mxu0 0
  %506 = vmatmul.mubr.bf16.gmra.mrb[0].mxu0 %v366
  %v507 = vpop.f32.mrb[0].mxu0
  %v508 = vadd.f32 0.0, %v507
  %v509 = vpop.f32.mrb[0].mxu0
  %v510 = vpop.f32.mrb[0].mxu0
  %v511 = vadd.f32 0.0, %v510
  %v512 = vpop.f32.mrb[0].mxu0
  %513 = vmatprep.mubr.bf16.mxu0 0
  %514 = vmatmul.mubr.bf16.gmra.mrb[0].mxu0 %v369
  %v515 = vpop.f32.mrb[0].mxu0
  %v516 = vadd.f32 0.0, %v515
  %v517 = vpop.f32.mrb[0].mxu0
  %v518 = vpop.f32.mrb[0].mxu0
  %v519 = vadd.f32 0.0, %v518
  %v520 = vpop.f32.mrb[0].mxu0
  %521 = vmatprep.mubr.bf16.mxu0 0
  %522 = vmatmul.mubr.bf16.gmra.mrb[0].mxu0 %v372
  %v523 = vpop.f32.mrb[0].mxu0
  %v524 = vadd.f32 0.0, %v523
  %v525 = vpop.f32.mrb[0].mxu0
  %v526 = vpop.f32.mrb[0].mxu0
  %v527 = vadd.f32 0.0, %v526
  %v528 = vpop.f32.mrb[0].mxu0
  %529 = vmatprep.mubr.bf16.mxu0 0
  %530 = vmatmul.mubr.bf16.gmra.mrb[0].mxu0 %v375
  %v531 = vpop.f32.mrb[0].mxu0
  %v532 = vadd.f32 0.0, %v531
  %v533 = vpop.f32.mrb[0].mxu0
  %v534 = vpop.f32.mrb[0].mxu0
  %v535 = vadd.f32 0.0, %v534
  %v536 = vpop.f32.mrb[0].mxu0
  %537 = vdwg.mxu0
  %v540 = vunpack.c.l.s4 1983009808
  %v541 = vunpack.c.0.s8 %v540
  %v542 = vlaneseq
  %v543 = vshrl.u32 %v542, 7
  %v544 = vsub.s32 %v541, %v543
  %v545 = vrot.slane %v23, %v544
  %v546 = vcombine.high %v545, %v545
  %549 = vxpose.xlu0.c.b16.start [1/8] %v545, 128
  %550 = vxpose.xlu0.c.b16.cont [2/8] 0, 128
  %551 = vxpose.xlu0.c.b16.cont [3/8] 0, 128
  %552 = vxpose.xlu0.c.b16.cont [4/8] 0, 128
  %553 = vxpose.xlu0.c.b16.cont [5/8] 0, 128
  %554 = vxpose.xlu0.c.b16.cont [6/8] 0, 128
  %555 = vxpose.xlu0.c.b16.cont [7/8] 0, 128
  %556 = vxpose.xlu0.c.b16.end [8/8] 0, 128
  %v557 = vpop.trf.xlu0
  %v558 = vpop.trf.xlu0
  %v559 = vpop.trf.xlu0
  %v560 = vpop.trf.xlu0
  %v561 = vpop.trf.xlu0
  %v562 = vpop.trf.xlu0
  %v563 = vpop.trf.xlu0
  %v564 = vpop.trf.xlu0
  %565 = vxpose.xlu0.c.b16.start [1/8] %v546, 128
  %566 = vxpose.xlu0.c.b16.cont [2/8] 0, 128
  %567 = vxpose.xlu0.c.b16.cont [3/8] 0, 128
  %568 = vxpose.xlu0.c.b16.cont [4/8] 0, 128
  %569 = vxpose.xlu0.c.b16.cont [5/8] 0, 128
  %570 = vxpose.xlu0.c.b16.cont [6/8] 0, 128
  %571 = vxpose.xlu0.c.b16.cont [7/8] 0, 128
  %572 = vxpose.xlu0.c.b16.end [8/8] 0, 128
  %v573 = vpop.trf.xlu0
  %v574 = vpop.trf.xlu0
  %v575 = vpop.trf.xlu0
  %v576 = vpop.trf.xlu0
  %v577 = vpop.trf.xlu0
  %v578 = vpop.trf.xlu0
  %v579 = vpop.trf.xlu0
  %v580 = vpop.trf.xlu0
  %v582 = vsel %vm72, %v557, 0
  %v585 = vsel %vm72, %v558, 0
  %v588 = vsel %vm72, %v559, 0
  %v591 = vsel %vm72, %v560, 0
  %v594 = vsel %vm72, %v561, 0
  %v597 = vsel %vm72, %v562, 0
  %v600 = vsel %vm72, %v563, 0
  %v603 = vsel %vm72, %v564, 0
  %v606 = vsel %vm72, %v573, 0
  %v609 = vsel %vm72, %v574, 0
  %v612 = vsel %vm72, %v575, 0
  %v615 = vsel %vm72, %v576, 0
  %v618 = vsel %vm72, %v577, 0
  %v621 = vsel %vm72, %v578, 0
  %v624 = vsel %vm72, %v579, 0
  %v627 = vsel %vm72, %v580, 0
  %629 = vmatprep.subr.bf16.mxu0 0
  %630 = vmatpush1.bf16.msra.mxu0 %v123
  %631 = vmatprep.subr.bf16.mxu0 0
  %632 = vmatpush1.bf16.msra.mxu0 0
  %633 = vmatprep.subr.bf16.mxu0 0
  %634 = vmatpush1.bf16.msra.mxu0 0
  %635 = vmatprep.subr.bf16.mxu0 0
  %636 = vmatpush1.bf16.msra.mxu0 0
  %637 = vmatprep.subr.bf16.mxu0 0
  %638 = vmatpush1.bf16.msra.mxu0 0
  %639 = vmatprep.subr.bf16.mxu0 0
  %640 = vmatpush1.bf16.msra.mxu0 0
  %641 = vmatprep.subr.bf16.mxu0 0
  %642 = vmatpush1.bf16.msra.mxu0 0
  %643 = vmatprep.subr.bf16.mxu0 0
  %644 = vmatpush1.bf16.msra.mxu0 0
  %645 = vmatprep.subr.bf16.mxu0 0
  %646 = vmatpush1.bf16.msra.mxu0 0
  %647 = vmatprep.subr.bf16.mxu0 0
  %648 = vmatpush1.bf16.msra.mxu0 0
  %649 = vmatprep.subr.bf16.mxu0 0
  %650 = vmatpush1.bf16.msra.mxu0 0
  %651 = vmatprep.subr.bf16.mxu0 0
  %652 = vmatpush1.bf16.msra.mxu0 0
  %653 = vmatprep.subr.bf16.mxu0 0
  %654 = vmatpush1.bf16.msra.mxu0 0
  %655 = vmatprep.subr.bf16.mxu0 0
  %656 = vmatpush1.bf16.msra.mxu0 0
  %657 = vmatprep.subr.bf16.mxu0 0
  %658 = vmatpush1.bf16.msra.mxu0 0
  %659 = vmatprep.subr.bf16.mxu0 0
  %660 = vmatpush1.bf16.msra.mxu0 0
  %661 = vmatprep.mubr.bf16.mxu0 0
  %662 = vmatmul.mubr.bf16.gmra.mrb[0].mxu0 %v582
  %v663 = vpop.f32.mrb[0].mxu0
  %v664 = vadd.f32 0.0, %v663
  %v665 = vpop.f32.mrb[0].mxu0
  %v666 = vpop.f32.mrb[0].mxu0
  %v667 = vadd.f32 0.0, %v666
  %v668 = vpop.f32.mrb[0].mxu0
  %669 = vmatprep.mubr.bf16.mxu0 0
  %670 = vmatmul.mubr.bf16.gmra.mrb[0].mxu0 %v585
  %v671 = vpop.f32.mrb[0].mxu0
  %v672 = vadd.f32 0.0, %v671
  %v673 = vpop.f32.mrb[0].mxu0
  %v674 = vpop.f32.mrb[0].mxu0
  %v675 = vadd.f32 0.0, %v674
  %v676 = vpop.f32.mrb[0].mxu0
  %677 = vmatprep.mubr.bf16.mxu0 0
  %678 = vmatmul.mubr.bf16.gmra.mrb[0].mxu0 %v588
  %v679 = vpop.f32.mrb[0].mxu0
  %v680 = vadd.f32 0.0, %v679
  %v681 = vpop.f32.mrb[0].mxu0
  %v682 = vpop.f32.mrb[0].mxu0
  %v683 = vadd.f32 0.0, %v682
  %v684 = vpop.f32.mrb[0].mxu0
  %685 = vmatprep.mubr.bf16.mxu0 0
  %686 = vmatmul.mubr.bf16.gmra.mrb[0].mxu0 %v591
  %v687 = vpop.f32.mrb[0].mxu0
  %v688 = vadd.f32 0.0, %v687
  %v689 = vpop.f32.mrb[0].mxu0
  %v690 = vpop.f32.mrb[0].mxu0
  %v691 = vadd.f32 0.0, %v690
  %v692 = vpop.f32.mrb[0].mxu0
  %693 = vmatprep.mubr.bf16.mxu0 0
  %694 = vmatmul.mubr.bf16.gmra.mrb[0].mxu0 %v594
  %v695 = vpop.f32.mrb[0].mxu0
  %v696 = vadd.f32 0.0, %v695
  %v697 = vpop.f32.mrb[0].mxu0
  %v698 = vpop.f32.mrb[0].mxu0
  %v699 = vadd.f32 0.0, %v698
  %v700 = vpop.f32.mrb[0].mxu0
  %701 = vmatprep.mubr.bf16.mxu0 0
  %702 = vmatmul.mubr.bf16.gmra.mrb[0].mxu0 %v597
  %v703 = vpop.f32.mrb[0].mxu0
  %v704 = vadd.f32 0.0, %v703
  %v705 = vpop.f32.mrb[0].mxu0
  %v706 = vpop.f32.mrb[0].mxu0
  %v707 = vadd.f32 0.0, %v706
  %v708 = vpop.f32.mrb[0].mxu0
  %709 = vmatprep.mubr.bf16.mxu0 0
  %710 = vmatmul.mubr.bf16.gmra.mrb[0].mxu0 %v600
  %v711 = vpop.f32.mrb[0].mxu0
  %v712 = vadd.f32 0.0, %v711
  %v713 = vpop.f32.mrb[0].mxu0
  %v714 = vpop.f32.mrb[0].mxu0
  %v715 = vadd.f32 0.0, %v714
  %v716 = vpop.f32.mrb[0].mxu0
  %717 = vmatprep.mubr.bf16.mxu0 0
  %718 = vmatmul.mubr.bf16.gmra.mrb[0].mxu0 %v603
  %v719 = vpop.f32.mrb[0].mxu0
  %v720 = vadd.f32 0.0, %v719
  %v721 = vpop.f32.mrb[0].mxu0
  %v722 = vpop.f32.mrb[0].mxu0
  %v723 = vadd.f32 0.0, %v722
  %v724 = vpop.f32.mrb[0].mxu0
  %725 = vmatprep.mubr.bf16.mxu0 0
  %726 = vmatmul.mubr.bf16.gmra.mrb[0].mxu0 %v606
  %v727 = vpop.f32.mrb[0].mxu0
  %v728 = vadd.f32 0.0, %v727
  %v729 = vpop.f32.mrb[0].mxu0
  %v730 = vpop.f32.mrb[0].mxu0
  %v731 = vadd.f32 0.0, %v730
  %v732 = vpop.f32.mrb[0].mxu0
  %733 = vmatprep.mubr.bf16.mxu0 0
  %734 = vmatmul.mubr.bf16.gmra.mrb[0].mxu0 %v609
  %v735 = vpop.f32.mrb[0].mxu0
  %v736 = vadd.f32 0.0, %v735
  %v737 = vpop.f32.mrb[0].mxu0
  %v738 = vpop.f32.mrb[0].mxu0
  %v739 = vadd.f32 0.0, %v738
  %v740 = vpop.f32.mrb[0].mxu0
  %741 = vmatprep.mubr.bf16.mxu0 0
  %742 = vmatmul.mubr.bf16.gmra.mrb[0].mxu0 %v612
  %v743 = vpop.f32.mrb[0].mxu0
  %v744 = vadd.f32 0.0, %v743
  %v745 = vpop.f32.mrb[0].mxu0
  %v746 = vpop.f32.mrb[0].mxu0
  %v747 = vadd.f32 0.0, %v746
  %v748 = vpop.f32.mrb[0].mxu0
  %749 = vmatprep.mubr.bf16.mxu0 0
  %750 = vmatmul.mubr.bf16.gmra.mrb[0].mxu0 %v615
  %v751 = vpop.f32.mrb[0].mxu0
  %v752 = vadd.f32 0.0, %v751
  %v753 = vpop.f32.mrb[0].mxu0
  %v754 = vpop.f32.mrb[0].mxu0
  %v755 = vadd.f32 0.0, %v754
  %v756 = vpop.f32.mrb[0].mxu0
  %757 = vmatprep.mubr.bf16.mxu0 0
  %758 = vmatmul.mubr.bf16.gmra.mrb[0].mxu0 %v618
  %v759 = vpop.f32.mrb[0].mxu0
  %v760 = vadd.f32 0.0, %v759
  %v761 = vpop.f32.mrb[0].mxu0
  %v762 = vpop.f32.mrb[0].mxu0
  %v763 = vadd.f32 0.0, %v762
  %v764 = vpop.f32.mrb[0].mxu0
  %765 = vmatprep.mubr.bf16.mxu0 0
  %766 = vmatmul.mubr.bf16.gmra.mrb[0].mxu0 %v621
  %v767 = vpop.f32.mrb[0].mxu0
  %v768 = vadd.f32 0.0, %v767
  %v769 = vpop.f32.mrb[0].mxu0
  %v770 = vpop.f32.mrb[0].mxu0
  %v771 = vadd.f32 0.0, %v770
  %v772 = vpop.f32.mrb[0].mxu0
  %773 = vmatprep.mubr.bf16.mxu0 0
  %774 = vmatmul.mubr.bf16.gmra.mrb[0].mxu0 %v624
  %v775 = vpop.f32.mrb[0].mxu0
  %v776 = vadd.f32 0.0, %v775
  %v777 = vpop.f32.mrb[0].mxu0
  %v778 = vpop.f32.mrb[0].mxu0
  %v779 = vadd.f32 0.0, %v778
  %v780 = vpop.f32.mrb[0].mxu0
  %781 = vmatprep.mubr.bf16.mxu0 0
  %782 = vmatmul.mubr.bf16.gmra.mrb[0].mxu0 %v627
  %v783 = vpop.f32.mrb[0].mxu0
  %v784 = vadd.f32 0.0, %v783
  %v785 = vpop.f32.mrb[0].mxu0
  %v786 = vpop.f32.mrb[0].mxu0
  %v787 = vadd.f32 0.0, %v786
  %v788 = vpop.f32.mrb[0].mxu0
  %789 = vdwg.mxu0
  %v792 = vunpack.c.l.s4 1983009808
  %v793 = vunpack.c.0.s8 %v792
  %v794 = vlaneseq
  %v795 = vshrl.u32 %v794, 7
  %v796 = vsub.s32 %v793, %v795
  %v797 = vrot.slane %v24, %v796
  %v798 = vcombine.high %v797, %v797
  %801 = vxpose.xlu0.c.b16.start [1/8] %v797, 128
  %802 = vxpose.xlu0.c.b16.cont [2/8] 0, 128
  %803 = vxpose.xlu0.c.b16.cont [3/8] 0, 128
  %804 = vxpose.xlu0.c.b16.cont [4/8] 0, 128
  %805 = vxpose.xlu0.c.b16.cont [5/8] 0, 128
  %806 = vxpose.xlu0.c.b16.cont [6/8] 0, 128
  %807 = vxpose.xlu0.c.b16.cont [7/8] 0, 128
  %808 = vxpose.xlu0.c.b16.end [8/8] 0, 128
  %v809 = vpop.trf.xlu0
  %v810 = vpop.trf.xlu0
  %v811 = vpop.trf.xlu0
  %v812 = vpop.trf.xlu0
  %v813 = vpop.trf.xlu0
  %v814 = vpop.trf.xlu0
  %v815 = vpop.trf.xlu0
  %v816 = vpop.trf.xlu0
  %817 = vxpose.xlu0.c.b16.start [1/8] %v798, 128
  %818 = vxpose.xlu0.c.b16.cont [2/8] 0, 128
  %819 = vxpose.xlu0.c.b16.cont [3/8] 0, 128
  %820 = vxpose.xlu0.c.b16.cont [4/8] 0, 128
  %821 = vxpose.xlu0.c.b16.cont [5/8] 0, 128
  %822 = vxpose.xlu0.c.b16.cont [6/8] 0, 128
  %823 = vxpose.xlu0.c.b16.cont [7/8] 0, 128
  %824 = vxpose.xlu0.c.b16.end [8/8] 0, 128
  %v825 = vpop.trf.xlu0
  %v826 = vpop.trf.xlu0
  %v827 = vpop.trf.xlu0
  %v828 = vpop.trf.xlu0
  %v829 = vpop.trf.xlu0
  %v830 = vpop.trf.xlu0
  %v831 = vpop.trf.xlu0
  %v832 = vpop.trf.xlu0
  %v834 = vsel %vm72, %v809, 0
  %v837 = vsel %vm72, %v810, 0
  %v840 = vsel %vm72, %v811, 0
  %v843 = vsel %vm72, %v812, 0
  %v846 = vsel %vm72, %v813, 0
  %v849 = vsel %vm72, %v814, 0
  %v852 = vsel %vm72, %v815, 0
  %v855 = vsel %vm72, %v816, 0
  %v858 = vsel %vm72, %v825, 0
  %v861 = vsel %vm72, %v826, 0
  %v864 = vsel %vm72, %v827, 0
  %v867 = vsel %vm72, %v828, 0
  %v870 = vsel %vm72, %v829, 0
  %v873 = vsel %vm72, %v830, 0
  %v876 = vsel %vm72, %v831, 0
  %v879 = vsel %vm72, %v832, 0
  %881 = vmatprep.subr.bf16.mxu0 0
  %882 = vmatpush1.bf16.msra.mxu0 %v123
  %883 = vmatprep.subr.bf16.mxu0 0
  %884 = vmatpush1.bf16.msra.mxu0 0
  %885 = vmatprep.subr.bf16.mxu0 0
  %886 = vmatpush1.bf16.msra.mxu0 0
  %887 = vmatprep.subr.bf16.mxu0 0
  %888 = vmatpush1.bf16.msra.mxu0 0
  %889 = vmatprep.subr.bf16.mxu0 0
  %890 = vmatpush1.bf16.msra.mxu0 0
  %891 = vmatprep.subr.bf16.mxu0 0
  %892 = vmatpush1.bf16.msra.mxu0 0
  %893 = vmatprep.subr.bf16.mxu0 0
  %894 = vmatpush1.bf16.msra.mxu0 0
  %895 = vmatprep.subr.bf16.mxu0 0
  %896 = vmatpush1.bf16.msra.mxu0 0
  %897 = vmatprep.subr.bf16.mxu0 0
  %898 = vmatpush1.bf16.msra.mxu0 0
  %899 = vmatprep.subr.bf16.mxu0 0
  %900 = vmatpush1.bf16.msra.mxu0 0
  %901 = vmatprep.subr.bf16.mxu0 0
  %902 = vmatpush1.bf16.msra.mxu0 0
  %903 = vmatprep.subr.bf16.mxu0 0
  %904 = vmatpush1.bf16.msra.mxu0 0
  %905 = vmatprep.subr.bf16.mxu0 0
  %906 = vmatpush1.bf16.msra.mxu0 0
  %907 = vmatprep.subr.bf16.mxu0 0
  %908 = vmatpush1.bf16.msra.mxu0 0
  %909 = vmatprep.subr.bf16.mxu0 0
  %910 = vmatpush1.bf16.msra.mxu0 0
  %911 = vmatprep.subr.bf16.mxu0 0
  %912 = vmatpush1.bf16.msra.mxu0 0
  %913 = vmatprep.mubr.bf16.mxu0 0
  %914 = vmatmul.mubr.bf16.gmra.mrb[0].mxu0 %v834
  %v915 = vpop.f32.mrb[0].mxu0
  %v916 = vadd.f32 0.0, %v915
  %v917 = vpop.f32.mrb[0].mxu0
  %v918 = vpop.f32.mrb[0].mxu0
  %v919 = vadd.f32 0.0, %v918
  %v920 = vpop.f32.mrb[0].mxu0
  %921 = vmatprep.mubr.bf16.mxu0 0
  %922 = vmatmul.mubr.bf16.gmra.mrb[0].mxu0 %v837
  %v923 = vpop.f32.mrb[0].mxu0
  %v924 = vadd.f32 0.0, %v923
  %v925 = vpop.f32.mrb[0].mxu0
  %v926 = vpop.f32.mrb[0].mxu0
  %v927 = vadd.f32 0.0, %v926
  %v928 = vpop.f32.mrb[0].mxu0
  %929 = vmatprep.mubr.bf16.mxu0 0
  %930 = vmatmul.mubr.bf16.gmra.mrb[0].mxu0 %v840
  %v931 = vpop.f32.mrb[0].mxu0
  %v932 = vadd.f32 0.0, %v931
  %v933 = vpop.f32.mrb[0].mxu0
  %v934 = vpop.f32.mrb[0].mxu0
  %v935 = vadd.f32 0.0, %v934
  %v936 = vpop.f32.mrb[0].mxu0
  %937 = vmatprep.mubr.bf16.mxu0 0
  %938 = vmatmul.mubr.bf16.gmra.mrb[0].mxu0 %v843
  %v939 = vpop.f32.mrb[0].mxu0
  %v940 = vadd.f32 0.0, %v939
  %v941 = vpop.f32.mrb[0].mxu0
  %v942 = vpop.f32.mrb[0].mxu0
  %v943 = vadd.f32 0.0, %v942
  %v944 = vpop.f32.mrb[0].mxu0
  %945 = vmatprep.mubr.bf16.mxu0 0
  %946 = vmatmul.mubr.bf16.gmra.mrb[0].mxu0 %v846
  %v947 = vpop.f32.mrb[0].mxu0
  %v948 = vadd.f32 0.0, %v947
  %v949 = vpop.f32.mrb[0].mxu0
  %v950 = vpop.f32.mrb[0].mxu0
  %v951 = vadd.f32 0.0, %v950
  %v952 = vpop.f32.mrb[0].mxu0
  %953 = vmatprep.mubr.bf16.mxu0 0
  %954 = vmatmul.mubr.bf16.gmra.mrb[0].mxu0 %v849
  %v955 = vpop.f32.mrb[0].mxu0
  %v956 = vadd.f32 0.0, %v955
  %v957 = vpop.f32.mrb[0].mxu0
  %v958 = vpop.f32.mrb[0].mxu0
  %v959 = vadd.f32 0.0, %v958
  %v960 = vpop.f32.mrb[0].mxu0
  %961 = vmatprep.mubr.bf16.mxu0 0
  %962 = vmatmul.mubr.bf16.gmra.mrb[0].mxu0 %v852
  %v963 = vpop.f32.mrb[0].mxu0
  %v964 = vadd.f32 0.0, %v963
  %v965 = vpop.f32.mrb[0].mxu0
  %v966 = vpop.f32.mrb[0].mxu0
  %v967 = vadd.f32 0.0, %v966
  %v968 = vpop.f32.mrb[0].mxu0
  %969 = vmatprep.mubr.bf16.mxu0 0
  %970 = vmatmul.mubr.bf16.gmra.mrb[0].mxu0 %v855
  %v971 = vpop.f32.mrb[0].mxu0
  %v972 = vadd.f32 0.0, %v971
  %v973 = vpop.f32.mrb[0].mxu0
  %v974 = vpop.f32.mrb[0].mxu0
  %v975 = vadd.f32 0.0, %v974
  %v976 = vpop.f32.mrb[0].mxu0
  %977 = vmatprep.mubr.bf16.mxu0 0
  %978 = vmatmul.mubr.bf16.gmra.mrb[0].mxu0 %v858
  %v979 = vpop.f32.mrb[0].mxu0
  %v980 = vadd.f32 0.0, %v979
  %v981 = vpop.f32.mrb[0].mxu0
  %v982 = vpop.f32.mrb[0].mxu0
  %v983 = vadd.f32 0.0, %v982
  %v984 = vpop.f32.mrb[0].mxu0
  %985 = vmatprep.mubr.bf16.mxu0 0
  %986 = vmatmul.mubr.bf16.gmra.mrb[0].mxu0 %v861
  %v987 = vpop.f32.mrb[0].mxu0
  %v988 = vadd.f32 0.0, %v987
  %v989 = vpop.f32.mrb[0].mxu0
  %v990 = vpop.f32.mrb[0].mxu0
  %v991 = vadd.f32 0.0, %v990
  %v992 = vpop.f32.mrb[0].mxu0
  %993 = vmatprep.mubr.bf16.mxu0 0
  %994 = vmatmul.mubr.bf16.gmra.mrb[0].mxu0 %v864
  %v995 = vpop.f32.mrb[0].mxu0
  %v996 = vadd.f32 0.0, %v995
  %v997 = vpop.f32.mrb[0].mxu0
  %v998 = vpop.f32.mrb[0].mxu0
  %v999 = vadd.f32 0.0, %v998
  %v1000 = vpop.f32.mrb[0].mxu0
  %1001 = vmatprep.mubr.bf16.mxu0 0
  %1002 = vmatmul.mubr.bf16.gmra.mrb[0].mxu0 %v867
  %v1003 = vpop.f32.mrb[0].mxu0
  %v1004 = vadd.f32 0.0, %v1003
  %v1005 = vpop.f32.mrb[0].mxu0
  %v1006 = vpop.f32.mrb[0].mxu0
  %v1007 = vadd.f32 0.0, %v1006
  %v1008 = vpop.f32.mrb[0].mxu0
  %1009 = vmatprep.mubr.bf16.mxu0 0
  %1010 = vmatmul.mubr.bf16.gmra.mrb[0].mxu0 %v870
  %v1011 = vpop.f32.mrb[0].mxu0
  %v1012 = vadd.f32 0.0, %v1011
  %v1013 = vpop.f32.mrb[0].mxu0
  %v1014 = vpop.f32.mrb[0].mxu0
  %v1015 = vadd.f32 0.0, %v1014
  %v1016 = vpop.f32.mrb[0].mxu0
  %1017 = vmatprep.mubr.bf16.mxu0 0
  %1018 = vmatmul.mubr.bf16.gmra.mrb[0].mxu0 %v873
  %v1019 = vpop.f32.mrb[0].mxu0
  %v1020 = vadd.f32 0.0, %v1019
  %v1021 = vpop.f32.mrb[0].mxu0
  %v1022 = vpop.f32.mrb[0].mxu0
  %v1023 = vadd.f32 0.0, %v1022
  %v1024 = vpop.f32.mrb[0].mxu0
  %1025 = vmatprep.mubr.bf16.mxu0 0
  %1026 = vmatmul.mubr.bf16.gmra.mrb[0].mxu0 %v876
  %v1027 = vpop.f32.mrb[0].mxu0
  %v1028 = vadd.f32 0.0, %v1027
  %v1029 = vpop.f32.mrb[0].mxu0
  %v1030 = vpop.f32.mrb[0].mxu0
  %v1031 = vadd.f32 0.0, %v1030
  %v1032 = vpop.f32.mrb[0].mxu0
  %1033 = vmatprep.mubr.bf16.mxu0 0
  %1034 = vmatmul.mubr.bf16.gmra.mrb[0].mxu0 %v879
  %v1035 = vpop.f32.mrb[0].mxu0
  %v1036 = vadd.f32 0.0, %v1035
  %v1037 = vpop.f32.mrb[0].mxu0
  %v1038 = vpop.f32.mrb[0].mxu0
  %v1039 = vadd.f32 0.0, %v1038
  %v1040 = vpop.f32.mrb[0].mxu0
  %1041 = vdwg.mxu0
  %v1044 = vunpack.c.l.s4 1983009808
  %v1045 = vunpack.c.0.s8 %v1044
  %v1046 = vlaneseq
  %v1047 = vshrl.u32 %v1046, 7
  %v1048 = vsub.s32 %v1045, %v1047
  %v1049 = vrot.slane %v25, %v1048
  %v1050 = vcombine.high %v1049, %v1049
  %1053 = vxpose.xlu0.c.b16.start [1/8] %v1049, 128
  %1054 = vxpose.xlu0.c.b16.cont [2/8] 0, 128
  %1055 = vxpose.xlu0.c.b16.cont [3/8] 0, 128
  %1056 = vxpose.xlu0.c.b16.cont [4/8] 0, 128
  %1057 = vxpose.xlu0.c.b16.cont [5/8] 0, 128
  %1058 = vxpose.xlu0.c.b16.cont [6/8] 0, 128
  %1059 = vxpose.xlu0.c.b16.cont [7/8] 0, 128
  %1060 = vxpose.xlu0.c.b16.end [8/8] 0, 128
  %v1061 = vpop.trf.xlu0
  %v1062 = vpop.trf.xlu0
  %v1063 = vpop.trf.xlu0
  %v1064 = vpop.trf.xlu0
  %v1065 = vpop.trf.xlu0
  %v1066 = vpop.trf.xlu0
  %v1067 = vpop.trf.xlu0
  %v1068 = vpop.trf.xlu0
  %1069 = vxpose.xlu0.c.b16.start [1/8] %v1050, 128
  %1070 = vxpose.xlu0.c.b16.cont [2/8] 0, 128
  %1071 = vxpose.xlu0.c.b16.cont [3/8] 0, 128
  %1072 = vxpose.xlu0.c.b16.cont [4/8] 0, 128
  %1073 = vxpose.xlu0.c.b16.cont [5/8] 0, 128
  %1074 = vxpose.xlu0.c.b16.cont [6/8] 0, 128
  %1075 = vxpose.xlu0.c.b16.cont [7/8] 0, 128
  %1076 = vxpose.xlu0.c.b16.end [8/8] 0, 128
  %v1077 = vpop.trf.xlu0
  %v1078 = vpop.trf.xlu0
  %v1079 = vpop.trf.xlu0
  %v1080 = vpop.trf.xlu0
  %v1081 = vpop.trf.xlu0
  %v1082 = vpop.trf.xlu0
  %v1083 = vpop.trf.xlu0
  %v1084 = vpop.trf.xlu0
  %v1086 = vsel %vm72, %v1061, 0
  %v1089 = vsel %vm72, %v1062, 0
  %v1092 = vsel %vm72, %v1063, 0
  %v1095 = vsel %vm72, %v1064, 0
  %v1098 = vsel %vm72, %v1065, 0
  %v1101 = vsel %vm72, %v1066, 0
  %v1104 = vsel %vm72, %v1067, 0
  %v1107 = vsel %vm72, %v1068, 0
  %v1110 = vsel %vm72, %v1077, 0
  %v1113 = vsel %vm72, %v1078, 0
  %v1116 = vsel %vm72, %v1079, 0
  %v1119 = vsel %vm72, %v1080, 0
  %v1122 = vsel %vm72, %v1081, 0
  %v1125 = vsel %vm72, %v1082, 0
  %v1128 = vsel %vm72, %v1083, 0
  %v1131 = vsel %vm72, %v1084, 0
  %1133 = vmatprep.subr.bf16.mxu0 0
  %1134 = vmatpush1.bf16.msra.mxu0 %v123
  %1135 = vmatprep.subr.bf16.mxu0 0
  %1136 = vmatpush1.bf16.msra.mxu0 0
  %1137 = vmatprep.subr.bf16.mxu0 0
  %1138 = vmatpush1.bf16.msra.mxu0 0
  %1139 = vmatprep.subr.bf16.mxu0 0
  %1140 = vmatpush1.bf16.msra.mxu0 0
  %1141 = vmatprep.subr.bf16.mxu0 0
  %1142 = vmatpush1.bf16.msra.mxu0 0
  %1143 = vmatprep.subr.bf16.mxu0 0
  %1144 = vmatpush1.bf16.msra.mxu0 0
  %1145 = vmatprep.subr.bf16.mxu0 0
  %1146 = vmatpush1.bf16.msra.mxu0 0
  %1147 = vmatprep.subr.bf16.mxu0 0
  %1148 = vmatpush1.bf16.msra.mxu0 0
  %1149 = vmatprep.subr.bf16.mxu0 0
  %1150 = vmatpush1.bf16.msra.mxu0 0
  %1151 = vmatprep.subr.bf16.mxu0 0
  %1152 = vmatpush1.bf16.msra.mxu0 0
  %1153 = vmatprep.subr.bf16.mxu0 0
  %1154 = vmatpush1.bf16.msra.mxu0 0
  %1155 = vmatprep.subr.bf16.mxu0 0
  %1156 = vmatpush1.bf16.msra.mxu0 0
  %1157 = vmatprep.subr.bf16.mxu0 0
  %1158 = vmatpush1.bf16.msra.mxu0 0
  %1159 = vmatprep.subr.bf16.mxu0 0
  %1160 = vmatpush1.bf16.msra.mxu0 0
  %1161 = vmatprep.subr.bf16.mxu0 0
  %1162 = vmatpush1.bf16.msra.mxu0 0
  %1163 = vmatprep.subr.bf16.mxu0 0
  %1164 = vmatpush1.bf16.msra.mxu0 0
  %1165 = vmatprep.mubr.bf16.mxu0 0
  %1166 = vmatmul.mubr.bf16.gmra.mrb[0].mxu0 %v1086
  %v1167 = vpop.f32.mrb[0].mxu0
  %v1168 = vadd.f32 0.0, %v1167
  %v1169 = vpop.f32.mrb[0].mxu0
  %v1170 = vpop.f32.mrb[0].mxu0
  %v1171 = vadd.f32 0.0, %v1170
  %v1172 = vpop.f32.mrb[0].mxu0
  %1173 = vmatprep.mubr.bf16.mxu0 0
  %1174 = vmatmul.mubr.bf16.gmra.mrb[0].mxu0 %v1089
  %v1175 = vpop.f32.mrb[0].mxu0
  %v1176 = vadd.f32 0.0, %v1175
  %v1177 = vpop.f32.mrb[0].mxu0
  %v1178 = vpop.f32.mrb[0].mxu0
  %v1179 = vadd.f32 0.0, %v1178
  %v1180 = vpop.f32.mrb[0].mxu0
  %1181 = vmatprep.mubr.bf16.mxu0 0
  %1182 = vmatmul.mubr.bf16.gmra.mrb[0].mxu0 %v1092
  %v1183 = vpop.f32.mrb[0].mxu0
  %v1184 = vadd.f32 0.0, %v1183
  %v1185 = vpop.f32.mrb[0].mxu0
  %v1186 = vpop.f32.mrb[0].mxu0
  %v1187 = vadd.f32 0.0, %v1186
  %v1188 = vpop.f32.mrb[0].mxu0
  %1189 = vmatprep.mubr.bf16.mxu0 0
  %1190 = vmatmul.mubr.bf16.gmra.mrb[0].mxu0 %v1095
  %v1191 = vpop.f32.mrb[0].mxu0
  %v1192 = vadd.f32 0.0, %v1191
  %v1193 = vpop.f32.mrb[0].mxu0
  %v1194 = vpop.f32.mrb[0].mxu0
  %v1195 = vadd.f32 0.0, %v1194
  %v1196 = vpop.f32.mrb[0].mxu0
  %1197 = vmatprep.mubr.bf16.mxu0 0
  %1198 = vmatmul.mubr.bf16.gmra.mrb[0].mxu0 %v1098
  %v1199 = vpop.f32.mrb[0].mxu0
  %v1200 = vadd.f32 0.0, %v1199
  %v1201 = vpop.f32.mrb[0].mxu0
  %v1202 = vpop.f32.mrb[0].mxu0
  %v1203 = vadd.f32 0.0, %v1202
  %v1204 = vpop.f32.mrb[0].mxu0
  %1205 = vmatprep.mubr.bf16.mxu0 0
  %1206 = vmatmul.mubr.bf16.gmra.mrb[0].mxu0 %v1101
  %v1207 = vpop.f32.mrb[0].mxu0
  %v1208 = vadd.f32 0.0, %v1207
  %v1209 = vpop.f32.mrb[0].mxu0
  %v1210 = vpop.f32.mrb[0].mxu0
  %v1211 = vadd.f32 0.0, %v1210
  %v1212 = vpop.f32.mrb[0].mxu0
  %1213 = vmatprep.mubr.bf16.mxu0 0
  %1214 = vmatmul.mubr.bf16.gmra.mrb[0].mxu0 %v1104
  %v1215 = vpop.f32.mrb[0].mxu0
  %v1216 = vadd.f32 0.0, %v1215
  %v1217 = vpop.f32.mrb[0].mxu0
  %v1218 = vpop.f32.mrb[0].mxu0
  %v1219 = vadd.f32 0.0, %v1218
  %v1220 = vpop.f32.mrb[0].mxu0
  %1221 = vmatprep.mubr.bf16.mxu0 0
  %1222 = vmatmul.mubr.bf16.gmra.mrb[0].mxu0 %v1107
  %v1223 = vpop.f32.mrb[0].mxu0
  %v1224 = vadd.f32 0.0, %v1223
  %v1225 = vpop.f32.mrb[0].mxu0
  %v1226 = vpop.f32.mrb[0].mxu0
  %v1227 = vadd.f32 0.0, %v1226
  %v1228 = vpop.f32.mrb[0].mxu0
  %1229 = vmatprep.mubr.bf16.mxu0 0
  %1230 = vmatmul.mubr.bf16.gmra.mrb[0].mxu0 %v1110
  %v1231 = vpop.f32.mrb[0].mxu0
  %v1232 = vadd.f32 0.0, %v1231
  %v1233 = vpop.f32.mrb[0].mxu0
  %v1234 = vpop.f32.mrb[0].mxu0
  %v1235 = vadd.f32 0.0, %v1234
  %v1236 = vpop.f32.mrb[0].mxu0
  %1237 = vmatprep.mubr.bf16.mxu0 0
  %1238 = vmatmul.mubr.bf16.gmra.mrb[0].mxu0 %v1113
  %v1239 = vpop.f32.mrb[0].mxu0
  %v1240 = vadd.f32 0.0, %v1239
  %v1241 = vpop.f32.mrb[0].mxu0
  %v1242 = vpop.f32.mrb[0].mxu0
  %v1243 = vadd.f32 0.0, %v1242
  %v1244 = vpop.f32.mrb[0].mxu0
  %1245 = vmatprep.mubr.bf16.mxu0 0
  %1246 = vmatmul.mubr.bf16.gmra.mrb[0].mxu0 %v1116
  %v1247 = vpop.f32.mrb[0].mxu0
  %v1248 = vadd.f32 0.0, %v1247
  %v1249 = vpop.f32.mrb[0].mxu0
  %v1250 = vpop.f32.mrb[0].mxu0
  %v1251 = vadd.f32 0.0, %v1250
  %v1252 = vpop.f32.mrb[0].mxu0
  %1253 = vmatprep.mubr.bf16.mxu0 0
  %1254 = vmatmul.mubr.bf16.gmra.mrb[0].mxu0 %v1119
  %v1255 = vpop.f32.mrb[0].mxu0
  %v1256 = vadd.f32 0.0, %v1255
  %v1257 = vpop.f32.mrb[0].mxu0
  %v1258 = vpop.f32.mrb[0].mxu0
  %v1259 = vadd.f32 0.0, %v1258
  %v1260 = vpop.f32.mrb[0].mxu0
  %1261 = vmatprep.mubr.bf16.mxu0 0
  %1262 = vmatmul.mubr.bf16.gmra.mrb[0].mxu0 %v1122
  %v1263 = vpop.f32.mrb[0].mxu0
  %v1264 = vadd.f32 0.0, %v1263
  %v1265 = vpop.f32.mrb[0].mxu0
  %v1266 = vpop.f32.mrb[0].mxu0
  %v1267 = vadd.f32 0.0, %v1266
  %v1268 = vpop.f32.mrb[0].mxu0
  %1269 = vmatprep.mubr.bf16.mxu0 0
  %1270 = vmatmul.mubr.bf16.gmra.mrb[0].mxu0 %v1125
  %v1271 = vpop.f32.mrb[0].mxu0
  %v1272 = vadd.f32 0.0, %v1271
  %v1273 = vpop.f32.mrb[0].mxu0
  %v1274 = vpop.f32.mrb[0].mxu0
  %v1275 = vadd.f32 0.0, %v1274
  %v1276 = vpop.f32.mrb[0].mxu0
  %1277 = vmatprep.mubr.bf16.mxu0 0
  %1278 = vmatmul.mubr.bf16.gmra.mrb[0].mxu0 %v1128
  %v1279 = vpop.f32.mrb[0].mxu0
  %v1280 = vadd.f32 0.0, %v1279
  %v1281 = vpop.f32.mrb[0].mxu0
  %v1282 = vpop.f32.mrb[0].mxu0
  %v1283 = vadd.f32 0.0, %v1282
  %v1284 = vpop.f32.mrb[0].mxu0
  %1285 = vmatprep.mubr.bf16.mxu0 0
  %1286 = vmatmul.mubr.bf16.gmra.mrb[0].mxu0 %v1131
  %v1287 = vpop.f32.mrb[0].mxu0
  %v1288 = vadd.f32 0.0, %v1287
  %v1289 = vpop.f32.mrb[0].mxu0
  %v1290 = vpop.f32.mrb[0].mxu0
  %v1291 = vadd.f32 0.0, %v1290
  %v1292 = vpop.f32.mrb[0].mxu0
  %1293 = vdwg.mxu0
  %v1296 = vunpack.c.l.s4 1983009808
  %v1297 = vunpack.c.0.s8 %v1296
  %v1298 = vlaneseq
  %v1299 = vshrl.u32 %v1298, 7
  %v1300 = vsub.s32 %v1297, %v1299
  %v1301 = vrot.slane %v26, %v1300
  %v1302 = vcombine.high %v1301, %v1301
  %1305 = vxpose.xlu0.c.b16.start [1/8] %v1301, 128
  %1306 = vxpose.xlu0.c.b16.cont [2/8] 0, 128
  %1307 = vxpose.xlu0.c.b16.cont [3/8] 0, 128
  %1308 = vxpose.xlu0.c.b16.cont [4/8] 0, 128
  %1309 = vxpose.xlu0.c.b16.cont [5/8] 0, 128
  %1310 = vxpose.xlu0.c.b16.cont [6/8] 0, 128
  %1311 = vxpose.xlu0.c.b16.cont [7/8] 0, 128
  %1312 = vxpose.xlu0.c.b16.end [8/8] 0, 128
  %v1313 = vpop.trf.xlu0
  %v1314 = vpop.trf.xlu0
  %v1315 = vpop.trf.xlu0
  %v1316 = vpop.trf.xlu0
  %v1317 = vpop.trf.xlu0
  %v1318 = vpop.trf.xlu0
  %v1319 = vpop.trf.xlu0
  %v1320 = vpop.trf.xlu0
  %1321 = vxpose.xlu0.c.b16.start [1/8] %v1302, 128
  %1322 = vxpose.xlu0.c.b16.cont [2/8] 0, 128
  %1323 = vxpose.xlu0.c.b16.cont [3/8] 0, 128
  %1324 = vxpose.xlu0.c.b16.cont [4/8] 0, 128
  %1325 = vxpose.xlu0.c.b16.cont [5/8] 0, 128
  %1326 = vxpose.xlu0.c.b16.cont [6/8] 0, 128
  %1327 = vxpose.xlu0.c.b16.cont [7/8] 0, 128
  %1328 = vxpose.xlu0.c.b16.end [8/8] 0, 128
  %v1329 = vpop.trf.xlu0
  %v1330 = vpop.trf.xlu0
  %v1331 = vpop.trf.xlu0
  %v1332 = vpop.trf.xlu0
  %v1333 = vpop.trf.xlu0
  %v1334 = vpop.trf.xlu0
  %v1335 = vpop.trf.xlu0
  %v1336 = vpop.trf.xlu0
  %v1338 = vsel %vm72, %v1313, 0
  %v1341 = vsel %vm72, %v1314, 0
  %v1344 = vsel %vm72, %v1315, 0
  %v1347 = vsel %vm72, %v1316, 0
  %v1350 = vsel %vm72, %v1317, 0
  %v1353 = vsel %vm72, %v1318, 0
  %v1356 = vsel %vm72, %v1319, 0
  %v1359 = vsel %vm72, %v1320, 0
  %v1362 = vsel %vm72, %v1329, 0
  %v1365 = vsel %vm72, %v1330, 0
  %v1368 = vsel %vm72, %v1331, 0
  %v1371 = vsel %vm72, %v1332, 0
  %v1374 = vsel %vm72, %v1333, 0
  %v1377 = vsel %vm72, %v1334, 0
  %v1380 = vsel %vm72, %v1335, 0
  %v1383 = vsel %vm72, %v1336, 0
  %1385 = vmatprep.subr.bf16.mxu0 0
  %1386 = vmatpush1.bf16.msra.mxu0 %v123
  %1387 = vmatprep.subr.bf16.mxu0 0
  %1388 = vmatpush1.bf16.msra.mxu0 0
  %1389 = vmatprep.subr.bf16.mxu0 0
  %1390 = vmatpush1.bf16.msra.mxu0 0
  %1391 = vmatprep.subr.bf16.mxu0 0
  %1392 = vmatpush1.bf16.msra.mxu0 0
  %1393 = vmatprep.subr.bf16.mxu0 0
  %1394 = vmatpush1.bf16.msra.mxu0 0
  %1395 = vmatprep.subr.bf16.mxu0 0
  %1396 = vmatpush1.bf16.msra.mxu0 0
  %1397 = vmatprep.subr.bf16.mxu0 0
  %1398 = vmatpush1.bf16.msra.mxu0 0
  %1399 = vmatprep.subr.bf16.mxu0 0
  %1400 = vmatpush1.bf16.msra.mxu0 0
  %1401 = vmatprep.subr.bf16.mxu0 0
  %1402 = vmatpush1.bf16.msra.mxu0 0
  %1403 = vmatprep.subr.bf16.mxu0 0
  %1404 = vmatpush1.bf16.msra.mxu0 0
  %1405 = vmatprep.subr.bf16.mxu0 0
  %1406 = vmatpush1.bf16.msra.mxu0 0
  %1407 = vmatprep.subr.bf16.mxu0 0
  %1408 = vmatpush1.bf16.msra.mxu0 0
  %1409 = vmatprep.subr.bf16.mxu0 0
  %1410 = vmatpush1.bf16.msra.mxu0 0
  %1411 = vmatprep.subr.bf16.mxu0 0
  %1412 = vmatpush1.bf16.msra.mxu0 0
  %1413 = vmatprep.subr.bf16.mxu0 0
  %1414 = vmatpush1.bf16.msra.mxu0 0
  %1415 = vmatprep.subr.bf16.mxu0 0
  %1416 = vmatpush1.bf16.msra.mxu0 0
  %1417 = vmatprep.mubr.bf16.mxu0 0
  %1418 = vmatmul.mubr.bf16.gmra.mrb[0].mxu0 %v1338
  %v1419 = vpop.f32.mrb[0].mxu0
  %v1420 = vadd.f32 0.0, %v1419
  %v1421 = vpop.f32.mrb[0].mxu0
  %v1422 = vpop.f32.mrb[0].mxu0
  %v1423 = vadd.f32 0.0, %v1422
  %v1424 = vpop.f32.mrb[0].mxu0
  %1425 = vmatprep.mubr.bf16.mxu0 0
  %1426 = vmatmul.mubr.bf16.gmra.mrb[0].mxu0 %v1341
  %v1427 = vpop.f32.mrb[0].mxu0
  %v1428 = vadd.f32 0.0, %v1427
  %v1429 = vpop.f32.mrb[0].mxu0
  %v1430 = vpop.f32.mrb[0].mxu0
  %v1431 = vadd.f32 0.0, %v1430
  %v1432 = vpop.f32.mrb[0].mxu0
  %1433 = vmatprep.mubr.bf16.mxu0 0
  %1434 = vmatmul.mubr.bf16.gmra.mrb[0].mxu0 %v1344
  %v1435 = vpop.f32.mrb[0].mxu0
  %v1436 = vadd.f32 0.0, %v1435
  %v1437 = vpop.f32.mrb[0].mxu0
  %v1438 = vpop.f32.mrb[0].mxu0
  %v1439 = vadd.f32 0.0, %v1438
  %v1440 = vpop.f32.mrb[0].mxu0
  %1441 = vmatprep.mubr.bf16.mxu0 0
  %1442 = vmatmul.mubr.bf16.gmra.mrb[0].mxu0 %v1347
  %v1443 = vpop.f32.mrb[0].mxu0
  %v1444 = vadd.f32 0.0, %v1443
  %v1445 = vpop.f32.mrb[0].mxu0
  %v1446 = vpop.f32.mrb[0].mxu0
  %v1447 = vadd.f32 0.0, %v1446
  %v1448 = vpop.f32.mrb[0].mxu0
  %1449 = vmatprep.mubr.bf16.mxu0 0
  %1450 = vmatmul.mubr.bf16.gmra.mrb[0].mxu0 %v1350
  %v1451 = vpop.f32.mrb[0].mxu0
  %v1452 = vadd.f32 0.0, %v1451
  %v1453 = vpop.f32.mrb[0].mxu0
  %v1454 = vpop.f32.mrb[0].mxu0
  %v1455 = vadd.f32 0.0, %v1454
  %v1456 = vpop.f32.mrb[0].mxu0
  %1457 = vmatprep.mubr.bf16.mxu0 0
  %1458 = vmatmul.mubr.bf16.gmra.mrb[0].mxu0 %v1353
  %v1459 = vpop.f32.mrb[0].mxu0
  %v1460 = vadd.f32 0.0, %v1459
  %v1461 = vpop.f32.mrb[0].mxu0
  %v1462 = vpop.f32.mrb[0].mxu0
  %v1463 = vadd.f32 0.0, %v1462
  %v1464 = vpop.f32.mrb[0].mxu0
  %1465 = vmatprep.mubr.bf16.mxu0 0
  %1466 = vmatmul.mubr.bf16.gmra.mrb[0].mxu0 %v1356
  %v1467 = vpop.f32.mrb[0].mxu0
  %v1468 = vadd.f32 0.0, %v1467
  %v1469 = vpop.f32.mrb[0].mxu0
  %v1470 = vpop.f32.mrb[0].mxu0
  %v1471 = vadd.f32 0.0, %v1470
  %v1472 = vpop.f32.mrb[0].mxu0
  %1473 = vmatprep.mubr.bf16.mxu0 0
  %1474 = vmatmul.mubr.bf16.gmra.mrb[0].mxu0 %v1359
  %v1475 = vpop.f32.mrb[0].mxu0
  %v1476 = vadd.f32 0.0, %v1475
  %v1477 = vpop.f32.mrb[0].mxu0
  %v1478 = vpop.f32.mrb[0].mxu0
  %v1479 = vadd.f32 0.0, %v1478
  %v1480 = vpop.f32.mrb[0].mxu0
  %1481 = vmatprep.mubr.bf16.mxu0 0
  %1482 = vmatmul.mubr.bf16.gmra.mrb[0].mxu0 %v1362
  %v1483 = vpop.f32.mrb[0].mxu0
  %v1484 = vadd.f32 0.0, %v1483
  %v1485 = vpop.f32.mrb[0].mxu0
  %v1486 = vpop.f32.mrb[0].mxu0
  %v1487 = vadd.f32 0.0, %v1486
  %v1488 = vpop.f32.mrb[0].mxu0
  %1489 = vmatprep.mubr.bf16.mxu0 0
  %1490 = vmatmul.mubr.bf16.gmra.mrb[0].mxu0 %v1365
  %v1491 = vpop.f32.mrb[0].mxu0
  %v1492 = vadd.f32 0.0, %v1491
  %v1493 = vpop.f32.mrb[0].mxu0
  %v1494 = vpop.f32.mrb[0].mxu0
  %v1495 = vadd.f32 0.0, %v1494
  %v1496 = vpop.f32.mrb[0].mxu0
  %1497 = vmatprep.mubr.bf16.mxu0 0
  %1498 = vmatmul.mubr.bf16.gmra.mrb[0].mxu0 %v1368
  %v1499 = vpop.f32.mrb[0].mxu0
  %v1500 = vadd.f32 0.0, %v1499
  %v1501 = vpop.f32.mrb[0].mxu0
  %v1502 = vpop.f32.mrb[0].mxu0
  %v1503 = vadd.f32 0.0, %v1502
  %v1504 = vpop.f32.mrb[0].mxu0
  %1505 = vmatprep.mubr.bf16.mxu0 0
  %1506 = vmatmul.mubr.bf16.gmra.mrb[0].mxu0 %v1371
  %v1507 = vpop.f32.mrb[0].mxu0
  %v1508 = vadd.f32 0.0, %v1507
  %v1509 = vpop.f32.mrb[0].mxu0
  %v1510 = vpop.f32.mrb[0].mxu0
  %v1511 = vadd.f32 0.0, %v1510
  %v1512 = vpop.f32.mrb[0].mxu0
  %1513 = vmatprep.mubr.bf16.mxu0 0
  %1514 = vmatmul.mubr.bf16.gmra.mrb[0].mxu0 %v1374
  %v1515 = vpop.f32.mrb[0].mxu0
  %v1516 = vadd.f32 0.0, %v1515
  %v1517 = vpop.f32.mrb[0].mxu0
  %v1518 = vpop.f32.mrb[0].mxu0
  %v1519 = vadd.f32 0.0, %v1518
  %v1520 = vpop.f32.mrb[0].mxu0
  %1521 = vmatprep.mubr.bf16.mxu0 0
  %1522 = vmatmul.mubr.bf16.gmra.mrb[0].mxu0 %v1377
  %v1523 = vpop.f32.mrb[0].mxu0
  %v1524 = vadd.f32 0.0, %v1523
  %v1525 = vpop.f32.mrb[0].mxu0
  %v1526 = vpop.f32.mrb[0].mxu0
  %v1527 = vadd.f32 0.0, %v1526
  %v1528 = vpop.f32.mrb[0].mxu0
  %1529 = vmatprep.mubr.bf16.mxu0 0
  %1530 = vmatmul.mubr.bf16.gmra.mrb[0].mxu0 %v1380
  %v1531 = vpop.f32.mrb[0].mxu0
  %v1532 = vadd.f32 0.0, %v1531
  %v1533 = vpop.f32.mrb[0].mxu0
  %v1534 = vpop.f32.mrb[0].mxu0
  %v1535 = vadd.f32 0.0, %v1534
  %v1536 = vpop.f32.mrb[0].mxu0
  %1537 = vmatprep.mubr.bf16.mxu0 0
  %1538 = vmatmul.mubr.bf16.gmra.mrb[0].mxu0 %v1383
  %v1539 = vpop.f32.mrb[0].mxu0
  %v1540 = vadd.f32 0.0, %v1539
  %v1541 = vpop.f32.mrb[0].mxu0
  %v1542 = vpop.f32.mrb[0].mxu0
  %v1543 = vadd.f32 0.0, %v1542
  %v1544 = vpop.f32.mrb[0].mxu0
  %1545 = vdwg.mxu0
  %v1548 = vunpack.c.l.s4 1983009808
  %v1549 = vunpack.c.0.s8 %v1548
  %v1550 = vlaneseq
  %v1551 = vshrl.u32 %v1550, 7
  %v1552 = vsub.s32 %v1549, %v1551
  %v1553 = vrot.slane %v27, %v1552
  %v1554 = vcombine.high %v1553, %v1553
  %1557 = vxpose.xlu0.c.b16.start [1/8] %v1553, 128
  %1558 = vxpose.xlu0.c.b16.cont [2/8] 0, 128
  %1559 = vxpose.xlu0.c.b16.cont [3/8] 0, 128
  %1560 = vxpose.xlu0.c.b16.cont [4/8] 0, 128
  %1561 = vxpose.xlu0.c.b16.cont [5/8] 0, 128
  %1562 = vxpose.xlu0.c.b16.cont [6/8] 0, 128
  %1563 = vxpose.xlu0.c.b16.cont [7/8] 0, 128
  %1564 = vxpose.xlu0.c.b16.end [8/8] 0, 128
  %v1565 = vpop.trf.xlu0
  %v1566 = vpop.trf.xlu0
  %v1567 = vpop.trf.xlu0
  %v1568 = vpop.trf.xlu0
  %v1569 = vpop.trf.xlu0
  %v1570 = vpop.trf.xlu0
  %v1571 = vpop.trf.xlu0
  %v1572 = vpop.trf.xlu0
  %1573 = vxpose.xlu0.c.b16.start [1/8] %v1554, 128
  %1574 = vxpose.xlu0.c.b16.cont [2/8] 0, 128
  %1575 = vxpose.xlu0.c.b16.cont [3/8] 0, 128
  %1576 = vxpose.xlu0.c.b16.cont [4/8] 0, 128
  %1577 = vxpose.xlu0.c.b16.cont [5/8] 0, 128
  %1578 = vxpose.xlu0.c.b16.cont [6/8] 0, 128
  %1579 = vxpose.xlu0.c.b16.cont [7/8] 0, 128
  %1580 = vxpose.xlu0.c.b16.end [8/8] 0, 128
  %v1581 = vpop.trf.xlu0
  %v1582 = vpop.trf.xlu0
  %v1583 = vpop.trf.xlu0
  %v1584 = vpop.trf.xlu0
  %v1585 = vpop.trf.xlu0
  %v1586 = vpop.trf.xlu0
  %v1587 = vpop.trf.xlu0
  %v1588 = vpop.trf.xlu0
  %v1590 = vsel %vm72, %v1565, 0
  %v1593 = vsel %vm72, %v1566, 0
  %v1596 = vsel %vm72, %v1567, 0
  %v1599 = vsel %vm72, %v1568, 0
  %v1602 = vsel %vm72, %v1569, 0
  %v1605 = vsel %vm72, %v1570, 0
  %v1608 = vsel %vm72, %v1571, 0
  %v1611 = vsel %vm72, %v1572, 0
  %v1614 = vsel %vm72, %v1581, 0
  %v1617 = vsel %vm72, %v1582, 0
  %v1620 = vsel %vm72, %v1583, 0
  %v1623 = vsel %vm72, %v1584, 0
  %v1626 = vsel %vm72, %v1585, 0
  %v1629 = vsel %vm72, %v1586, 0
  %v1632 = vsel %vm72, %v1587, 0
  %v1635 = vsel %vm72, %v1588, 0
  %1637 = vmatprep.subr.bf16.mxu0 0
  %1638 = vmatpush1.bf16.msra.mxu0 %v123
  %1639 = vmatprep.subr.bf16.mxu0 0
  %1640 = vmatpush1.bf16.msra.mxu0 0
  %1641 = vmatprep.subr.bf16.mxu0 0
  %1642 = vmatpush1.bf16.msra.mxu0 0
  %1643 = vmatprep.subr.bf16.mxu0 0
  %1644 = vmatpush1.bf16.msra.mxu0 0
  %1645 = vmatprep.subr.bf16.mxu0 0
  %1646 = vmatpush1.bf16.msra.mxu0 0
  %1647 = vmatprep.subr.bf16.mxu0 0
  %1648 = vmatpush1.bf16.msra.mxu0 0
  %1649 = vmatprep.subr.bf16.mxu0 0
  %1650 = vmatpush1.bf16.msra.mxu0 0
  %1651 = vmatprep.subr.bf16.mxu0 0
  %1652 = vmatpush1.bf16.msra.mxu0 0
  %1653 = vmatprep.subr.bf16.mxu0 0
  %1654 = vmatpush1.bf16.msra.mxu0 0
  %1655 = vmatprep.subr.bf16.mxu0 0
  %1656 = vmatpush1.bf16.msra.mxu0 0
  %1657 = vmatprep.subr.bf16.mxu0 0
  %1658 = vmatpush1.bf16.msra.mxu0 0
  %1659 = vmatprep.subr.bf16.mxu0 0
  %1660 = vmatpush1.bf16.msra.mxu0 0
  %1661 = vmatprep.subr.bf16.mxu0 0
  %1662 = vmatpush1.bf16.msra.mxu0 0
  %1663 = vmatprep.subr.bf16.mxu0 0
  %1664 = vmatpush1.bf16.msra.mxu0 0
  %1665 = vmatprep.subr.bf16.mxu0 0
  %1666 = vmatpush1.bf16.msra.mxu0 0
  %1667 = vmatprep.subr.bf16.mxu0 0
  %1668 = vmatpush1.bf16.msra.mxu0 0
  %1669 = vmatprep.mubr.bf16.mxu0 0
  %1670 = vmatmul.mubr.bf16.gmra.mrb[0].mxu0 %v1590
  %v1671 = vpop.f32.mrb[0].mxu0
  %v1672 = vadd.f32 0.0, %v1671
  %v1673 = vpop.f32.mrb[0].mxu0
  %v1674 = vpop.f32.mrb[0].mxu0
  %v1675 = vadd.f32 0.0, %v1674
  %v1676 = vpop.f32.mrb[0].mxu0
  %1677 = vmatprep.mubr.bf16.mxu0 0
  %1678 = vmatmul.mubr.bf16.gmra.mrb[0].mxu0 %v1593
  %v1679 = vpop.f32.mrb[0].mxu0
  %v1680 = vadd.f32 0.0, %v1679
  %v1681 = vpop.f32.mrb[0].mxu0
  %v1682 = vpop.f32.mrb[0].mxu0
  %v1683 = vadd.f32 0.0, %v1682
  %v1684 = vpop.f32.mrb[0].mxu0
  %1685 = vmatprep.mubr.bf16.mxu0 0
  %1686 = vmatmul.mubr.bf16.gmra.mrb[0].mxu0 %v1596
  %v1687 = vpop.f32.mrb[0].mxu0
  %v1688 = vadd.f32 0.0, %v1687
  %v1689 = vpop.f32.mrb[0].mxu0
  %v1690 = vpop.f32.mrb[0].mxu0
  %v1691 = vadd.f32 0.0, %v1690
  %v1692 = vpop.f32.mrb[0].mxu0
  %1693 = vmatprep.mubr.bf16.mxu0 0
  %1694 = vmatmul.mubr.bf16.gmra.mrb[0].mxu0 %v1599
  %v1695 = vpop.f32.mrb[0].mxu0
  %v1696 = vadd.f32 0.0, %v1695
  %v1697 = vpop.f32.mrb[0].mxu0
  %v1698 = vpop.f32.mrb[0].mxu0
  %v1699 = vadd.f32 0.0, %v1698
  %v1700 = vpop.f32.mrb[0].mxu0
  %1701 = vmatprep.mubr.bf16.mxu0 0
  %1702 = vmatmul.mubr.bf16.gmra.mrb[0].mxu0 %v1602
  %v1703 = vpop.f32.mrb[0].mxu0
  %v1704 = vadd.f32 0.0, %v1703
  %v1705 = vpop.f32.mrb[0].mxu0
  %v1706 = vpop.f32.mrb[0].mxu0
  %v1707 = vadd.f32 0.0, %v1706
  %v1708 = vpop.f32.mrb[0].mxu0
  %1709 = vmatprep.mubr.bf16.mxu0 0
  %1710 = vmatmul.mubr.bf16.gmra.mrb[0].mxu0 %v1605
  %v1711 = vpop.f32.mrb[0].mxu0
  %v1712 = vadd.f32 0.0, %v1711
  %v1713 = vpop.f32.mrb[0].mxu0
  %v1714 = vpop.f32.mrb[0].mxu0
  %v1715 = vadd.f32 0.0, %v1714
  %v1716 = vpop.f32.mrb[0].mxu0
  %1717 = vmatprep.mubr.bf16.mxu0 0
  %1718 = vmatmul.mubr.bf16.gmra.mrb[0].mxu0 %v1608
  %v1719 = vpop.f32.mrb[0].mxu0
  %v1720 = vadd.f32 0.0, %v1719
  %v1721 = vpop.f32.mrb[0].mxu0
  %v1722 = vpop.f32.mrb[0].mxu0
  %v1723 = vadd.f32 0.0, %v1722
  %v1724 = vpop.f32.mrb[0].mxu0
  %1725 = vmatprep.mubr.bf16.mxu0 0
  %1726 = vmatmul.mubr.bf16.gmra.mrb[0].mxu0 %v1611
  %v1727 = vpop.f32.mrb[0].mxu0
  %v1728 = vadd.f32 0.0, %v1727
  %v1729 = vpop.f32.mrb[0].mxu0
  %v1730 = vpop.f32.mrb[0].mxu0
  %v1731 = vadd.f32 0.0, %v1730
  %v1732 = vpop.f32.mrb[0].mxu0
  %1733 = vmatprep.mubr.bf16.mxu0 0
  %1734 = vmatmul.mubr.bf16.gmra.mrb[0].mxu0 %v1614
  %v1735 = vpop.f32.mrb[0].mxu0
  %v1736 = vadd.f32 0.0, %v1735
  %v1737 = vpop.f32.mrb[0].mxu0
  %v1738 = vpop.f32.mrb[0].mxu0
  %v1739 = vadd.f32 0.0, %v1738
  %v1740 = vpop.f32.mrb[0].mxu0
  %1741 = vmatprep.mubr.bf16.mxu0 0
  %1742 = vmatmul.mubr.bf16.gmra.mrb[0].mxu0 %v1617
  %v1743 = vpop.f32.mrb[0].mxu0
  %v1744 = vadd.f32 0.0, %v1743
  %v1745 = vpop.f32.mrb[0].mxu0
  %v1746 = vpop.f32.mrb[0].mxu0
  %v1747 = vadd.f32 0.0, %v1746
  %v1748 = vpop.f32.mrb[0].mxu0
  %1749 = vmatprep.mubr.bf16.mxu0 0
  %1750 = vmatmul.mubr.bf16.gmra.mrb[0].mxu0 %v1620
  %v1751 = vpop.f32.mrb[0].mxu0
  %v1752 = vadd.f32 0.0, %v1751
  %v1753 = vpop.f32.mrb[0].mxu0
  %v1754 = vpop.f32.mrb[0].mxu0
  %v1755 = vadd.f32 0.0, %v1754
  %v1756 = vpop.f32.mrb[0].mxu0
  %1757 = vmatprep.mubr.bf16.mxu0 0
  %1758 = vmatmul.mubr.bf16.gmra.mrb[0].mxu0 %v1623
  %v1759 = vpop.f32.mrb[0].mxu0
  %v1760 = vadd.f32 0.0, %v1759
  %v1761 = vpop.f32.mrb[0].mxu0
  %v1762 = vpop.f32.mrb[0].mxu0
  %v1763 = vadd.f32 0.0, %v1762
  %v1764 = vpop.f32.mrb[0].mxu0
  %1765 = vmatprep.mubr.bf16.mxu0 0
  %1766 = vmatmul.mubr.bf16.gmra.mrb[0].mxu0 %v1626
  %v1767 = vpop.f32.mrb[0].mxu0
  %v1768 = vadd.f32 0.0, %v1767
  %v1769 = vpop.f32.mrb[0].mxu0
  %v1770 = vpop.f32.mrb[0].mxu0
  %v1771 = vadd.f32 0.0, %v1770
  %v1772 = vpop.f32.mrb[0].mxu0
  %1773 = vmatprep.mubr.bf16.mxu0 0
  %1774 = vmatmul.mubr.bf16.gmra.mrb[0].mxu0 %v1629
  %v1775 = vpop.f32.mrb[0].mxu0
  %v1776 = vadd.f32 0.0, %v1775
  %v1777 = vpop.f32.mrb[0].mxu0
  %v1778 = vpop.f32.mrb[0].mxu0
  %v1779 = vadd.f32 0.0, %v1778
  %v1780 = vpop.f32.mrb[0].mxu0
  %1781 = vmatprep.mubr.bf16.mxu0 0
  %1782 = vmatmul.mubr.bf16.gmra.mrb[0].mxu0 %v1632
  %v1783 = vpop.f32.mrb[0].mxu0
  %v1784 = vadd.f32 0.0, %v1783
  %v1785 = vpop.f32.mrb[0].mxu0
  %v1786 = vpop.f32.mrb[0].mxu0
  %v1787 = vadd.f32 0.0, %v1786
  %v1788 = vpop.f32.mrb[0].mxu0
  %1789 = vmatprep.mubr.bf16.mxu0 0
  %1790 = vmatmul.mubr.bf16.gmra.mrb[0].mxu0 %v1635
  %v1791 = vpop.f32.mrb[0].mxu0
  %v1792 = vadd.f32 0.0, %v1791
  %v1793 = vpop.f32.mrb[0].mxu0
  %v1794 = vpop.f32.mrb[0].mxu0
  %v1795 = vadd.f32 0.0, %v1794
  %v1796 = vpop.f32.mrb[0].mxu0
  %1797 = vdwg.mxu0
  %v1800 = vunpack.c.l.s4 1983009808
  %v1801 = vunpack.c.0.s8 %v1800
  %v1802 = vlaneseq
  %v1803 = vshrl.u32 %v1802, 7
  %v1804 = vsub.s32 %v1801, %v1803
  %v1805 = vrot.slane %v28, %v1804
  %v1806 = vcombine.high %v1805, %v1805
  %1809 = vxpose.xlu0.c.b16.start [1/8] %v1805, 128
  %1810 = vxpose.xlu0.c.b16.cont [2/8] 0, 128
  %1811 = vxpose.xlu0.c.b16.cont [3/8] 0, 128
  %1812 = vxpose.xlu0.c.b16.cont [4/8] 0, 128
  %1813 = vxpose.xlu0.c.b16.cont [5/8] 0, 128
  %1814 = vxpose.xlu0.c.b16.cont [6/8] 0, 128
  %1815 = vxpose.xlu0.c.b16.cont [7/8] 0, 128
  %1816 = vxpose.xlu0.c.b16.end [8/8] 0, 128
  %v1817 = vpop.trf.xlu0
  %v1818 = vpop.trf.xlu0
  %v1819 = vpop.trf.xlu0
  %v1820 = vpop.trf.xlu0
  %v1821 = vpop.trf.xlu0
  %v1822 = vpop.trf.xlu0
  %v1823 = vpop.trf.xlu0
  %v1824 = vpop.trf.xlu0
  %1825 = vxpose.xlu0.c.b16.start [1/8] %v1806, 128
  %1826 = vxpose.xlu0.c.b16.cont [2/8] 0, 128
  %1827 = vxpose.xlu0.c.b16.cont [3/8] 0, 128
  %1828 = vxpose.xlu0.c.b16.cont [4/8] 0, 128
  %1829 = vxpose.xlu0.c.b16.cont [5/8] 0, 128
  %1830 = vxpose.xlu0.c.b16.cont [6/8] 0, 128
  %1831 = vxpose.xlu0.c.b16.cont [7/8] 0, 128
  %1832 = vxpose.xlu0.c.b16.end [8/8] 0, 128
  %v1833 = vpop.trf.xlu0
  %v1834 = vpop.trf.xlu0
  %v1835 = vpop.trf.xlu0
  %v1836 = vpop.trf.xlu0
  %v1837 = vpop.trf.xlu0
  %v1838 = vpop.trf.xlu0
  %v1839 = vpop.trf.xlu0
  %v1840 = vpop.trf.xlu0
  %v1842 = vsel %vm72, %v1817, 0
  %v1845 = vsel %vm72, %v1818, 0
  %v1848 = vsel %vm72, %v1819, 0
  %v1851 = vsel %vm72, %v1820, 0
  %v1854 = vsel %vm72, %v1821, 0
  %v1857 = vsel %vm72, %v1822, 0
  %v1860 = vsel %vm72, %v1823, 0
  %v1863 = vsel %vm72, %v1824, 0
  %v1866 = vsel %vm72, %v1833, 0
  %v1869 = vsel %vm72, %v1834, 0
  %v1872 = vsel %vm72, %v1835, 0
  %v1875 = vsel %vm72, %v1836, 0
  %v1878 = vsel %vm72, %v1837, 0
  %v1881 = vsel %vm72, %v1838, 0
  %v1884 = vsel %vm72, %v1839, 0
  %v1887 = vsel %vm72, %v1840, 0
  %1889 = vmatprep.subr.bf16.mxu0 0
  %1890 = vmatpush1.bf16.msra.mxu0 %v123
  %1891 = vmatprep.subr.bf16.mxu0 0
  %1892 = vmatpush1.bf16.msra.mxu0 0
  %1893 = vmatprep.subr.bf16.mxu0 0
  %1894 = vmatpush1.bf16.msra.mxu0 0
  %1895 = vmatprep.subr.bf16.mxu0 0
  %1896 = vmatpush1.bf16.msra.mxu0 0
  %1897 = vmatprep.subr.bf16.mxu0 0
  %1898 = vmatpush1.bf16.msra.mxu0 0
  %1899 = vmatprep.subr.bf16.mxu0 0
  %1900 = vmatpush1.bf16.msra.mxu0 0
  %1901 = vmatprep.subr.bf16.mxu0 0
  %1902 = vmatpush1.bf16.msra.mxu0 0
  %1903 = vmatprep.subr.bf16.mxu0 0
  %1904 = vmatpush1.bf16.msra.mxu0 0
  %1905 = vmatprep.subr.bf16.mxu0 0
  %1906 = vmatpush1.bf16.msra.mxu0 0
  %1907 = vmatprep.subr.bf16.mxu0 0
  %1908 = vmatpush1.bf16.msra.mxu0 0
  %1909 = vmatprep.subr.bf16.mxu0 0
  %1910 = vmatpush1.bf16.msra.mxu0 0
  %1911 = vmatprep.subr.bf16.mxu0 0
  %1912 = vmatpush1.bf16.msra.mxu0 0
  %1913 = vmatprep.subr.bf16.mxu0 0
  %1914 = vmatpush1.bf16.msra.mxu0 0
  %1915 = vmatprep.subr.bf16.mxu0 0
  %1916 = vmatpush1.bf16.msra.mxu0 0
  %1917 = vmatprep.subr.bf16.mxu0 0
  %1918 = vmatpush1.bf16.msra.mxu0 0
  %1919 = vmatprep.subr.bf16.mxu0 0
  %1920 = vmatpush1.bf16.msra.mxu0 0
  %1921 = vmatprep.mubr.bf16.mxu0 0
  %1922 = vmatmul.mubr.bf16.gmra.mrb[0].mxu0 %v1842
  %v1923 = vpop.f32.mrb[0].mxu0
  %v1924 = vadd.f32 0.0, %v1923
  %v1925 = vpop.f32.mrb[0].mxu0
  %v1926 = vpop.f32.mrb[0].mxu0
  %v1927 = vadd.f32 0.0, %v1926
  %v1928 = vpop.f32.mrb[0].mxu0
  %1929 = vmatprep.mubr.bf16.mxu0 0
  %1930 = vmatmul.mubr.bf16.gmra.mrb[0].mxu0 %v1845
  %v1931 = vpop.f32.mrb[0].mxu0
  %v1932 = vadd.f32 0.0, %v1931
  %v1933 = vpop.f32.mrb[0].mxu0
  %v1934 = vpop.f32.mrb[0].mxu0
  %v1935 = vadd.f32 0.0, %v1934
  %v1936 = vpop.f32.mrb[0].mxu0
  %1937 = vmatprep.mubr.bf16.mxu0 0
  %1938 = vmatmul.mubr.bf16.gmra.mrb[0].mxu0 %v1848
  %v1939 = vpop.f32.mrb[0].mxu0
  %v1940 = vadd.f32 0.0, %v1939
  %v1941 = vpop.f32.mrb[0].mxu0
  %v1942 = vpop.f32.mrb[0].mxu0
  %v1943 = vadd.f32 0.0, %v1942
  %v1944 = vpop.f32.mrb[0].mxu0
  %1945 = vmatprep.mubr.bf16.mxu0 0
  %1946 = vmatmul.mubr.bf16.gmra.mrb[0].mxu0 %v1851
  %v1947 = vpop.f32.mrb[0].mxu0
  %v1948 = vadd.f32 0.0, %v1947
  %v1949 = vpop.f32.mrb[0].mxu0
  %v1950 = vpop.f32.mrb[0].mxu0
  %v1951 = vadd.f32 0.0, %v1950
  %v1952 = vpop.f32.mrb[0].mxu0
  %1953 = vmatprep.mubr.bf16.mxu0 0
  %1954 = vmatmul.mubr.bf16.gmra.mrb[0].mxu0 %v1854
  %v1955 = vpop.f32.mrb[0].mxu0
  %v1956 = vadd.f32 0.0, %v1955
  %v1957 = vpop.f32.mrb[0].mxu0
  %v1958 = vpop.f32.mrb[0].mxu0
  %v1959 = vadd.f32 0.0, %v1958
  %v1960 = vpop.f32.mrb[0].mxu0
  %1961 = vmatprep.mubr.bf16.mxu0 0
  %1962 = vmatmul.mubr.bf16.gmra.mrb[0].mxu0 %v1857
  %v1963 = vpop.f32.mrb[0].mxu0
  %v1964 = vadd.f32 0.0, %v1963
  %v1965 = vpop.f32.mrb[0].mxu0
  %v1966 = vpop.f32.mrb[0].mxu0
  %v1967 = vadd.f32 0.0, %v1966
  %v1968 = vpop.f32.mrb[0].mxu0
  %1969 = vmatprep.mubr.bf16.mxu0 0
  %1970 = vmatmul.mubr.bf16.gmra.mrb[0].mxu0 %v1860
  %v1971 = vpop.f32.mrb[0].mxu0
  %v1972 = vadd.f32 0.0, %v1971
  %v1973 = vpop.f32.mrb[0].mxu0
  %v1974 = vpop.f32.mrb[0].mxu0
  %v1975 = vadd.f32 0.0, %v1974
  %v1976 = vpop.f32.mrb[0].mxu0
  %1977 = vmatprep.mubr.bf16.mxu0 0
  %1978 = vmatmul.mubr.bf16.gmra.mrb[0].mxu0 %v1863
  %v1979 = vpop.f32.mrb[0].mxu0
  %v1980 = vadd.f32 0.0, %v1979
  %v1981 = vpop.f32.mrb[0].mxu0
  %v1982 = vpop.f32.mrb[0].mxu0
  %v1983 = vadd.f32 0.0, %v1982
  %v1984 = vpop.f32.mrb[0].mxu0
  %1985 = vmatprep.mubr.bf16.mxu0 0
  %1986 = vmatmul.mubr.bf16.gmra.mrb[0].mxu0 %v1866
  %v1987 = vpop.f32.mrb[0].mxu0
  %v1988 = vadd.f32 0.0, %v1987
  %v1989 = vpop.f32.mrb[0].mxu0
  %v1990 = vpop.f32.mrb[0].mxu0
  %v1991 = vadd.f32 0.0, %v1990
  %v1992 = vpop.f32.mrb[0].mxu0
  %1993 = vmatprep.mubr.bf16.mxu0 0
  %1994 = vmatmul.mubr.bf16.gmra.mrb[0].mxu0 %v1869
  %v1995 = vpop.f32.mrb[0].mxu0
  %v1996 = vadd.f32 0.0, %v1995
  %v1997 = vpop.f32.mrb[0].mxu0
  %v1998 = vpop.f32.mrb[0].mxu0
  %v1999 = vadd.f32 0.0, %v1998
  %v2000 = vpop.f32.mrb[0].mxu0
  %2001 = vmatprep.mubr.bf16.mxu0 0
  %2002 = vmatmul.mubr.bf16.gmra.mrb[0].mxu0 %v1872
  %v2003 = vpop.f32.mrb[0].mxu0
  %v2004 = vadd.f32 0.0, %v2003
  %v2005 = vpop.f32.mrb[0].mxu0
  %v2006 = vpop.f32.mrb[0].mxu0
  %v2007 = vadd.f32 0.0, %v2006
  %v2008 = vpop.f32.mrb[0].mxu0
  %2009 = vmatprep.mubr.bf16.mxu0 0
  %2010 = vmatmul.mubr.bf16.gmra.mrb[0].mxu0 %v1875
  %v2011 = vpop.f32.mrb[0].mxu0
  %v2012 = vadd.f32 0.0, %v2011
  %v2013 = vpop.f32.mrb[0].mxu0
  %v2014 = vpop.f32.mrb[0].mxu0
  %v2015 = vadd.f32 0.0, %v2014
  %v2016 = vpop.f32.mrb[0].mxu0
  %2017 = vmatprep.mubr.bf16.mxu0 0
  %2018 = vmatmul.mubr.bf16.gmra.mrb[0].mxu0 %v1878
  %v2019 = vpop.f32.mrb[0].mxu0
  %v2020 = vadd.f32 0.0, %v2019
  %v2021 = vpop.f32.mrb[0].mxu0
  %v2022 = vpop.f32.mrb[0].mxu0
  %v2023 = vadd.f32 0.0, %v2022
  %v2024 = vpop.f32.mrb[0].mxu0
  %2025 = vmatprep.mubr.bf16.mxu0 0
  %2026 = vmatmul.mubr.bf16.gmra.mrb[0].mxu0 %v1881
  %v2027 = vpop.f32.mrb[0].mxu0
  %v2028 = vadd.f32 0.0, %v2027
  %v2029 = vpop.f32.mrb[0].mxu0
  %v2030 = vpop.f32.mrb[0].mxu0
  %v2031 = vadd.f32 0.0, %v2030
  %v2032 = vpop.f32.mrb[0].mxu0
  %2033 = vmatprep.mubr.bf16.mxu0 0
  %2034 = vmatmul.mubr.bf16.gmra.mrb[0].mxu0 %v1884
  %v2035 = vpop.f32.mrb[0].mxu0
  %v2036 = vadd.f32 0.0, %v2035
  %v2037 = vpop.f32.mrb[0].mxu0
  %v2038 = vpop.f32.mrb[0].mxu0
  %v2039 = vadd.f32 0.0, %v2038
  %v2040 = vpop.f32.mrb[0].mxu0
  %2041 = vmatprep.mubr.bf16.mxu0 0
  %2042 = vmatmul.mubr.bf16.gmra.mrb[0].mxu0 %v1887
  %v2043 = vpop.f32.mrb[0].mxu0
  %v2044 = vadd.f32 0.0, %v2043
  %v2045 = vpop.f32.mrb[0].mxu0
  %v2046 = vpop.f32.mrb[0].mxu0
  %v2047 = vadd.f32 0.0, %v2046
  %v2048 = vpop.f32.mrb[0].mxu0
  %2049 = vdwg.mxu0
  %v2050 = vmax.f32 %v160, 0.0
  %v2051 = vmax.f32 %v163, 0.0
  %v2052 = vmax.f32 %v168, 0.0
  %v2053 = vmax.f32 %v171, 0.0
  %v2054 = vmax.f32 %v176, 0.0
  %v2055 = vmax.f32 %v179, 0.0
  %v2056 = vmax.f32 %v184, 0.0
  %v2057 = vmax.f32 %v187, 0.0
  %v2058 = vmax.f32 %v192, 0.0
  %v2059 = vmax.f32 %v195, 0.0
  %v2060 = vmax.f32 %v200, 0.0
  %v2061 = vmax.f32 %v203, 0.0
  %v2062 = vmax.f32 %v208, 0.0
  %v2063 = vmax.f32 %v211, 0.0
  %v2064 = vmax.f32 %v216, 0.0
  %v2065 = vmax.f32 %v219, 0.0
  %v2066 = vmax.f32 %v224, 0.0
  %v2067 = vmax.f32 %v227, 0.0
  %v2068 = vmax.f32 %v232, 0.0
  %v2069 = vmax.f32 %v235, 0.0
  %v2070 = vmax.f32 %v240, 0.0
  %v2071 = vmax.f32 %v243, 0.0
  %v2072 = vmax.f32 %v248, 0.0
  %v2073 = vmax.f32 %v251, 0.0
  %v2074 = vmax.f32 %v256, 0.0
  %v2075 = vmax.f32 %v259, 0.0
  %v2076 = vmax.f32 %v264, 0.0
  %v2077 = vmax.f32 %v267, 0.0
  %v2078 = vmax.f32 %v272, 0.0
  %v2079 = vmax.f32 %v275, 0.0
  %v2080 = vmax.f32 %v280, 0.0
  %v2081 = vmax.f32 %v283, 0.0
  %v2082 = vmax.f32 %v412, 0.0
  %v2083 = vmax.f32 %v415, 0.0
  %v2084 = vmax.f32 %v420, 0.0
  %v2085 = vmax.f32 %v423, 0.0
  %v2086 = vmax.f32 %v428, 0.0
  %v2087 = vmax.f32 %v431, 0.0
  %v2088 = vmax.f32 %v436, 0.0
  %v2089 = vmax.f32 %v439, 0.0
  %v2090 = vmax.f32 %v444, 0.0
  %v2091 = vmax.f32 %v447, 0.0
  %v2092 = vmax.f32 %v452, 0.0
  %v2093 = vmax.f32 %v455, 0.0
  %v2094 = vmax.f32 %v460, 0.0
  %v2095 = vmax.f32 %v463, 0.0
  %v2096 = vmax.f32 %v468, 0.0
  %v2097 = vmax.f32 %v471, 0.0
  %v2098 = vmax.f32 %v476, 0.0
  %v2099 = vmax.f32 %v479, 0.0
  %v2100 = vmax.f32 %v484, 0.0
  %v2101 = vmax.f32 %v487, 0.0
  %v2102 = vmax.f32 %v492, 0.0
  %v2103 = vmax.f32 %v495, 0.0
  %v2104 = vmax.f32 %v500, 0.0
  %v2105 = vmax.f32 %v503, 0.0
  %v2106 = vmax.f32 %v508, 0.0
  %v2107 = vmax.f32 %v511, 0.0
  %v2108 = vmax.f32 %v516, 0.0
  %v2109 = vmax.f32 %v519, 0.0
  %v2110 = vmax.f32 %v524, 0.0
  %v2111 = vmax.f32 %v527, 0.0
  %v2112 = vmax.f32 %v532, 0.0
  %v2113 = vmax.f32 %v535, 0.0
  %v2114 = vmax.f32 %v664, 0.0
  %v2115 = vmax.f32 %v667, 0.0
  %v2116 = vmax.f32 %v672, 0.0
  %v2117 = vmax.f32 %v675, 0.0
  %v2118 = vmax.f32 %v680, 0.0
  %v2119 = vmax.f32 %v683, 0.0
  %v2120 = vmax.f32 %v688, 0.0
  %v2121 = vmax.f32 %v691, 0.0
  %v2122 = vmax.f32 %v696, 0.0
  %v2123 = vmax.f32 %v699, 0.0
  %v2124 = vmax.f32 %v704, 0.0
  %v2125 = vmax.f32 %v707, 0.0
  %v2126 = vmax.f32 %v712, 0.0
  %v2127 = vmax.f32 %v715, 0.0
  %v2128 = vmax.f32 %v720, 0.0
  %v2129 = vmax.f32 %v723, 0.0
  %v2130 = vmax.f32 %v728, 0.0
  %v2131 = vmax.f32 %v731, 0.0
  %v2132 = vmax.f32 %v736, 0.0
  %v2133 = vmax.f32 %v739, 0.0
  %v2134 = vmax.f32 %v744, 0.0
  %v2135 = vmax.f32 %v747, 0.0
  %v2136 = vmax.f32 %v752, 0.0
  %v2137 = vmax.f32 %v755, 0.0
  %v2138 = vmax.f32 %v760, 0.0
  %v2139 = vmax.f32 %v763, 0.0
  %v2140 = vmax.f32 %v768, 0.0
  %v2141 = vmax.f32 %v771, 0.0
  %v2142 = vmax.f32 %v776, 0.0
  %v2143 = vmax.f32 %v779, 0.0
  %v2144 = vmax.f32 %v784, 0.0
  %v2145 = vmax.f32 %v787, 0.0
  %v2146 = vmax.f32 %v916, 0.0
  %v2147 = vmax.f32 %v919, 0.0
  %v2148 = vmax.f32 %v924, 0.0
  %v2149 = vmax.f32 %v927, 0.0
  %v2150 = vmax.f32 %v932, 0.0
  %v2151 = vmax.f32 %v935, 0.0
  %v2152 = vmax.f32 %v940, 0.0
  %v2153 = vmax.f32 %v943, 0.0
  %v2154 = vmax.f32 %v948, 0.0
  %v2155 = vmax.f32 %v951, 0.0
  %v2156 = vmax.f32 %v956, 0.0
  %v2157 = vmax.f32 %v959, 0.0
  %v2158 = vmax.f32 %v964, 0.0
  %v2159 = vmax.f32 %v967, 0.0
  %v2160 = vmax.f32 %v972, 0.0
  %v2161 = vmax.f32 %v975, 0.0
  %v2162 = vmax.f32 %v980, 0.0
  %v2163 = vmax.f32 %v983, 0.0
  %v2164 = vmax.f32 %v988, 0.0
  %v2165 = vmax.f32 %v991, 0.0
  %v2166 = vmax.f32 %v996, 0.0
  %v2167 = vmax.f32 %v999, 0.0
  %v2168 = vmax.f32 %v1004, 0.0
  %v2169 = vmax.f32 %v1007, 0.0
  %v2170 = vmax.f32 %v1012, 0.0
  %v2171 = vmax.f32 %v1015, 0.0
  %v2172 = vmax.f32 %v1020, 0.0
  %v2173 = vmax.f32 %v1023, 0.0
  %v2174 = vmax.f32 %v1028, 0.0
  %v2175 = vmax.f32 %v1031, 0.0
  %v2176 = vmax.f32 %v1036, 0.0
  %v2177 = vmax.f32 %v1039, 0.0
  %v2178 = vmax.f32 %v1168, 0.0
  %v2179 = vmax.f32 %v1171, 0.0
  %v2180 = vmax.f32 %v1176, 0.0
  %v2181 = vmax.f32 %v1179, 0.0
  %v2182 = vmax.f32 %v1184, 0.0
  %v2183 = vmax.f32 %v1187, 0.0
  %v2184 = vmax.f32 %v1192, 0.0
  %v2185 = vmax.f32 %v1195, 0.0
  %v2186 = vmax.f32 %v1200, 0.0
  %v2187 = vmax.f32 %v1203, 0.0
  %v2188 = vmax.f32 %v1208, 0.0
  %v2189 = vmax.f32 %v1211, 0.0
  %v2190 = vmax.f32 %v1216, 0.0
  %v2191 = vmax.f32 %v1219, 0.0
  %v2192 = vmax.f32 %v1224, 0.0
  %v2193 = vmax.f32 %v1227, 0.0
  %v2194 = vmax.f32 %v1232, 0.0
  %v2195 = vmax.f32 %v1235, 0.0
  %v2196 = vmax.f32 %v1240, 0.0
  %v2197 = vmax.f32 %v1243, 0.0
  %v2198 = vmax.f32 %v1248, 0.0
  %v2199 = vmax.f32 %v1251, 0.0
  %v2200 = vmax.f32 %v1256, 0.0
  %v2201 = vmax.f32 %v1259, 0.0
  %v2202 = vmax.f32 %v1264, 0.0
  %v2203 = vmax.f32 %v1267, 0.0
  %v2204 = vmax.f32 %v1272, 0.0
  %v2205 = vmax.f32 %v1275, 0.0
  %v2206 = vmax.f32 %v1280, 0.0
  %v2207 = vmax.f32 %v1283, 0.0
  %v2208 = vmax.f32 %v1288, 0.0
  %v2209 = vmax.f32 %v1291, 0.0
  %v2210 = vmax.f32 %v1420, 0.0
  %v2211 = vmax.f32 %v1423, 0.0
  %v2212 = vmax.f32 %v1428, 0.0
  %v2213 = vmax.f32 %v1431, 0.0
  %v2214 = vmax.f32 %v1436, 0.0
  %v2215 = vmax.f32 %v1439, 0.0
  %v2216 = vmax.f32 %v1444, 0.0
  %v2217 = vmax.f32 %v1447, 0.0
  %v2218 = vmax.f32 %v1452, 0.0
  %v2219 = vmax.f32 %v1455, 0.0
  %v2220 = vmax.f32 %v1460, 0.0
  %v2221 = vmax.f32 %v1463, 0.0
  %v2222 = vmax.f32 %v1468, 0.0
  %v2223 = vmax.f32 %v1471, 0.0
  %v2224 = vmax.f32 %v1476, 0.0
  %v2225 = vmax.f32 %v1479, 0.0
  %v2226 = vmax.f32 %v1484, 0.0
  %v2227 = vmax.f32 %v1487, 0.0
  %v2228 = vmax.f32 %v1492, 0.0
  %v2229 = vmax.f32 %v1495, 0.0
  %v2230 = vmax.f32 %v1500, 0.0
  %v2231 = vmax.f32 %v1503, 0.0
  %v2232 = vmax.f32 %v1508, 0.0
  %v2233 = vmax.f32 %v1511, 0.0
  %v2234 = vmax.f32 %v1516, 0.0
  %v2235 = vmax.f32 %v1519, 0.0
  %v2236 = vmax.f32 %v1524, 0.0
  %v2237 = vmax.f32 %v1527, 0.0
  %v2238 = vmax.f32 %v1532, 0.0
  %v2239 = vmax.f32 %v1535, 0.0
  %v2240 = vmax.f32 %v1540, 0.0
  %v2241 = vmax.f32 %v1543, 0.0
  %v2242 = vmax.f32 %v1672, 0.0
  %v2243 = vmax.f32 %v1675, 0.0
  %v2244 = vmax.f32 %v1680, 0.0
  %v2245 = vmax.f32 %v1683, 0.0
  %v2246 = vmax.f32 %v1688, 0.0
  %v2247 = vmax.f32 %v1691, 0.0
  %v2248 = vmax.f32 %v1696, 0.0
  %v2249 = vmax.f32 %v1699, 0.0
  %v2250 = vmax.f32 %v1704, 0.0
  %v2251 = vmax.f32 %v1707, 0.0
  %v2252 = vmax.f32 %v1712, 0.0
  %v2253 = vmax.f32 %v1715, 0.0
  %v2254 = vmax.f32 %v1720, 0.0
  %v2255 = vmax.f32 %v1723, 0.0
  %v2256 = vmax.f32 %v1728, 0.0
  %v2257 = vmax.f32 %v1731, 0.0
  %v2258 = vmax.f32 %v1736, 0.0
  %v2259 = vmax.f32 %v1739, 0.0
  %v2260 = vmax.f32 %v1744, 0.0
  %v2261 = vmax.f32 %v1747, 0.0
  %v2262 = vmax.f32 %v1752, 0.0
  %v2263 = vmax.f32 %v1755, 0.0
  %v2264 = vmax.f32 %v1760, 0.0
  %v2265 = vmax.f32 %v1763, 0.0
  %v2266 = vmax.f32 %v1768, 0.0
  %v2267 = vmax.f32 %v1771, 0.0
  %v2268 = vmax.f32 %v1776, 0.0
  %v2269 = vmax.f32 %v1779, 0.0
  %v2270 = vmax.f32 %v1784, 0.0
  %v2271 = vmax.f32 %v1787, 0.0
  %v2272 = vmax.f32 %v1792, 0.0
  %v2273 = vmax.f32 %v1795, 0.0
  %v2274 = vmax.f32 %v1924, 0.0
  %v2275 = vmax.f32 %v1927, 0.0
  %v2276 = vmax.f32 %v1932, 0.0
  %v2277 = vmax.f32 %v1935, 0.0
  %v2278 = vmax.f32 %v1940, 0.0
  %v2279 = vmax.f32 %v1943, 0.0
  %v2280 = vmax.f32 %v1948, 0.0
  %v2281 = vmax.f32 %v1951, 0.0
  %v2282 = vmax.f32 %v1956, 0.0
  %v2283 = vmax.f32 %v1959, 0.0
  %v2284 = vmax.f32 %v1964, 0.0
  %v2285 = vmax.f32 %v1967, 0.0
  %v2286 = vmax.f32 %v1972, 0.0
  %v2287 = vmax.f32 %v1975, 0.0
  %v2288 = vmax.f32 %v1980, 0.0
  %v2289 = vmax.f32 %v1983, 0.0
  %v2290 = vmax.f32 %v1988, 0.0
  %v2291 = vmax.f32 %v1991, 0.0
  %v2292 = vmax.f32 %v1996, 0.0
  %v2293 = vmax.f32 %v1999, 0.0
  %v2294 = vmax.f32 %v2004, 0.0
  %v2295 = vmax.f32 %v2007, 0.0
  %v2296 = vmax.f32 %v2012, 0.0
  %v2297 = vmax.f32 %v2015, 0.0
  %v2298 = vmax.f32 %v2020, 0.0
  %v2299 = vmax.f32 %v2023, 0.0
  %v2300 = vmax.f32 %v2028, 0.0
  %v2301 = vmax.f32 %v2031, 0.0
  %v2302 = vmax.f32 %v2036, 0.0
  %v2303 = vmax.f32 %v2039, 0.0
  %v2304 = vmax.f32 %v2044, 0.0
  %v2305 = vmax.f32 %v2047, 0.0
  %v2306 = vadd.f32 %v2050, %v2051
  %v2307 = vadd.f32 %v2306, %v2052
  %v2308 = vadd.f32 %v2307, %v2053
  %v2309 = vadd.f32 %v2308, %v2054
  %v2310 = vadd.f32 %v2309, %v2055
  %v2311 = vadd.f32 %v2310, %v2056
  %v2312 = vadd.f32 %v2311, %v2057
  %v2313 = vadd.f32 %v2312, %v2058
  %v2314 = vadd.f32 %v2313, %v2059
  %v2315 = vadd.f32 %v2314, %v2060
  %v2316 = vadd.f32 %v2315, %v2061
  %v2317 = vadd.f32 %v2316, %v2062
  %v2318 = vadd.f32 %v2317, %v2063
  %v2319 = vadd.f32 %v2318, %v2064
  %v2320 = vadd.f32 %v2319, %v2065
  %v2321 = vadd.f32 %v2320, %v2066
  %v2322 = vadd.f32 %v2321, %v2067
  %v2323 = vadd.f32 %v2322, %v2068
  %v2324 = vadd.f32 %v2323, %v2069
  %v2325 = vadd.f32 %v2324, %v2070
  %v2326 = vadd.f32 %v2325, %v2071
  %v2327 = vadd.f32 %v2326, %v2072
  %v2328 = vadd.f32 %v2327, %v2073
  %v2329 = vadd.f32 %v2328, %v2074
  %v2330 = vadd.f32 %v2329, %v2075
  %v2331 = vadd.f32 %v2330, %v2076
  %v2332 = vadd.f32 %v2331, %v2077
  %v2333 = vadd.f32 %v2332, %v2078
  %v2334 = vadd.f32 %v2333, %v2079
  %v2335 = vadd.f32 %v2334, %v2080
  %v2336 = vadd.f32 %v2335, %v2081
  %v2337 = vrot.slane %v2336, 4
  %v2338 = vadd.f32 %v2336, %v2337
  %v2339 = vrot.slane %v2338, 2
  %v2340 = vadd.f32 %v2338, %v2339
  %v2341 = vrot.slane %v2340, 1
  %v2342 = vadd.f32 %v2340, %v2341
  %v2343 = vadd.f32 %v2082, %v2083
  %v2344 = vadd.f32 %v2343, %v2084
  %v2345 = vadd.f32 %v2344, %v2085
  %v2346 = vadd.f32 %v2345, %v2086
  %v2347 = vadd.f32 %v2346, %v2087
  %v2348 = vadd.f32 %v2347, %v2088
  %v2349 = vadd.f32 %v2348, %v2089
  %v2350 = vadd.f32 %v2349, %v2090
  %v2351 = vadd.f32 %v2350, %v2091
  %v2352 = vadd.f32 %v2351, %v2092
  %v2353 = vadd.f32 %v2352, %v2093
  %v2354 = vadd.f32 %v2353, %v2094
  %v2355 = vadd.f32 %v2354, %v2095
  %v2356 = vadd.f32 %v2355, %v2096
  %v2357 = vadd.f32 %v2356, %v2097
  %v2358 = vadd.f32 %v2357, %v2098
  %v2359 = vadd.f32 %v2358, %v2099
  %v2360 = vadd.f32 %v2359, %v2100
  %v2361 = vadd.f32 %v2360, %v2101
  %v2362 = vadd.f32 %v2361, %v2102
  %v2363 = vadd.f32 %v2362, %v2103
  %v2364 = vadd.f32 %v2363, %v2104
  %v2365 = vadd.f32 %v2364, %v2105
  %v2366 = vadd.f32 %v2365, %v2106
  %v2367 = vadd.f32 %v2366, %v2107
  %v2368 = vadd.f32 %v2367, %v2108
  %v2369 = vadd.f32 %v2368, %v2109
  %v2370 = vadd.f32 %v2369, %v2110
  %v2371 = vadd.f32 %v2370, %v2111
  %v2372 = vadd.f32 %v2371, %v2112
  %v2373 = vadd.f32 %v2372, %v2113
  %v2374 = vrot.slane %v2373, 4
  %v2375 = vadd.f32 %v2373, %v2374
  %v2376 = vrot.slane %v2375, 2
  %v2377 = vadd.f32 %v2375, %v2376
  %v2378 = vrot.slane %v2377, 1
  %v2379 = vadd.f32 %v2377, %v2378
  %v2380 = vadd.f32 %v2114, %v2115
  %v2381 = vadd.f32 %v2380, %v2116
  %v2382 = vadd.f32 %v2381, %v2117
  %v2383 = vadd.f32 %v2382, %v2118
  %v2384 = vadd.f32 %v2383, %v2119
  %v2385 = vadd.f32 %v2384, %v2120
  %v2386 = vadd.f32 %v2385, %v2121
  %v2387 = vadd.f32 %v2386, %v2122
  %v2388 = vadd.f32 %v2387, %v2123
  %v2389 = vadd.f32 %v2388, %v2124
  %v2390 = vadd.f32 %v2389, %v2125
  %v2391 = vadd.f32 %v2390, %v2126
  %v2392 = vadd.f32 %v2391, %v2127
  %v2393 = vadd.f32 %v2392, %v2128
  %v2394 = vadd.f32 %v2393, %v2129
  %v2395 = vadd.f32 %v2394, %v2130
  %v2396 = vadd.f32 %v2395, %v2131
  %v2397 = vadd.f32 %v2396, %v2132
  %v2398 = vadd.f32 %v2397, %v2133
  %v2399 = vadd.f32 %v2398, %v2134
  %v2400 = vadd.f32 %v2399, %v2135
  %v2401 = vadd.f32 %v2400, %v2136
  %v2402 = vadd.f32 %v2401, %v2137
  %v2403 = vadd.f32 %v2402, %v2138
  %v2404 = vadd.f32 %v2403, %v2139
  %v2405 = vadd.f32 %v2404, %v2140
  %v2406 = vadd.f32 %v2405, %v2141
  %v2407 = vadd.f32 %v2406, %v2142
  %v2408 = vadd.f32 %v2407, %v2143
  %v2409 = vadd.f32 %v2408, %v2144
  %v2410 = vadd.f32 %v2409, %v2145
  %v2411 = vrot.slane %v2410, 4
  %v2412 = vadd.f32 %v2410, %v2411
  %v2413 = vrot.slane %v2412, 2
  %v2414 = vadd.f32 %v2412, %v2413
  %v2415 = vrot.slane %v2414, 1
  %v2416 = vadd.f32 %v2414, %v2415
  %v2417 = vadd.f32 %v2146, %v2147
  %v2418 = vadd.f32 %v2417, %v2148
  %v2419 = vadd.f32 %v2418, %v2149
  %v2420 = vadd.f32 %v2419, %v2150
  %v2421 = vadd.f32 %v2420, %v2151
  %v2422 = vadd.f32 %v2421, %v2152
  %v2423 = vadd.f32 %v2422, %v2153
  %v2424 = vadd.f32 %v2423, %v2154
  %v2425 = vadd.f32 %v2424, %v2155
  %v2426 = vadd.f32 %v2425, %v2156
  %v2427 = vadd.f32 %v2426, %v2157
  %v2428 = vadd.f32 %v2427, %v2158
  %v2429 = vadd.f32 %v2428, %v2159
  %v2430 = vadd.f32 %v2429, %v2160
  %v2431 = vadd.f32 %v2430, %v2161
  %v2432 = vadd.f32 %v2431, %v2162
  %v2433 = vadd.f32 %v2432, %v2163
  %v2434 = vadd.f32 %v2433, %v2164
  %v2435 = vadd.f32 %v2434, %v2165
  %v2436 = vadd.f32 %v2435, %v2166
  %v2437 = vadd.f32 %v2436, %v2167
  %v2438 = vadd.f32 %v2437, %v2168
  %v2439 = vadd.f32 %v2438, %v2169
  %v2440 = vadd.f32 %v2439, %v2170
  %v2441 = vadd.f32 %v2440, %v2171
  %v2442 = vadd.f32 %v2441, %v2172
  %v2443 = vadd.f32 %v2442, %v2173
  %v2444 = vadd.f32 %v2443, %v2174
  %v2445 = vadd.f32 %v2444, %v2175
  %v2446 = vadd.f32 %v2445, %v2176
  %v2447 = vadd.f32 %v2446, %v2177
  %v2448 = vrot.slane %v2447, 4
  %v2449 = vadd.f32 %v2447, %v2448
  %v2450 = vrot.slane %v2449, 2
  %v2451 = vadd.f32 %v2449, %v2450
  %v2452 = vrot.slane %v2451, 1
  %v2453 = vadd.f32 %v2451, %v2452
  %v2454 = vadd.f32 %v2178, %v2179
  %v2455 = vadd.f32 %v2454, %v2180
  %v2456 = vadd.f32 %v2455, %v2181
  %v2457 = vadd.f32 %v2456, %v2182
  %v2458 = vadd.f32 %v2457, %v2183
  %v2459 = vadd.f32 %v2458, %v2184
  %v2460 = vadd.f32 %v2459, %v2185
  %v2461 = vadd.f32 %v2460, %v2186
  %v2462 = vadd.f32 %v2461, %v2187
  %v2463 = vadd.f32 %v2462, %v2188
  %v2464 = vadd.f32 %v2463, %v2189
  %v2465 = vadd.f32 %v2464, %v2190
  %v2466 = vadd.f32 %v2465, %v2191
  %v2467 = vadd.f32 %v2466, %v2192
  %v2468 = vadd.f32 %v2467, %v2193
  %v2469 = vadd.f32 %v2468, %v2194
  %v2470 = vadd.f32 %v2469, %v2195
  %v2471 = vadd.f32 %v2470, %v2196
  %v2472 = vadd.f32 %v2471, %v2197
  %v2473 = vadd.f32 %v2472, %v2198
  %v2474 = vadd.f32 %v2473, %v2199
  %v2475 = vadd.f32 %v2474, %v2200
  %v2476 = vadd.f32 %v2475, %v2201
  %v2477 = vadd.f32 %v2476, %v2202
  %v2478 = vadd.f32 %v2477, %v2203
  %v2479 = vadd.f32 %v2478, %v2204
  %v2480 = vadd.f32 %v2479, %v2205
  %v2481 = vadd.f32 %v2480, %v2206
  %v2482 = vadd.f32 %v2481, %v2207
  %v2483 = vadd.f32 %v2482, %v2208
  %v2484 = vadd.f32 %v2483, %v2209
  %v2485 = vrot.slane %v2484, 4
  %v2486 = vadd.f32 %v2484, %v2485
  %v2487 = vrot.slane %v2486, 2
  %v2488 = vadd.f32 %v2486, %v2487
  %v2489 = vrot.slane %v2488, 1
  %v2490 = vadd.f32 %v2488, %v2489
  %v2491 = vadd.f32 %v2210, %v2211
  %v2492 = vadd.f32 %v2491, %v2212
  %v2493 = vadd.f32 %v2492, %v2213
  %v2494 = vadd.f32 %v2493, %v2214
  %v2495 = vadd.f32 %v2494, %v2215
  %v2496 = vadd.f32 %v2495, %v2216
  %v2497 = vadd.f32 %v2496, %v2217
  %v2498 = vadd.f32 %v2497, %v2218
  %v2499 = vadd.f32 %v2498, %v2219
  %v2500 = vadd.f32 %v2499, %v2220
  %v2501 = vadd.f32 %v2500, %v2221
  %v2502 = vadd.f32 %v2501, %v2222
  %v2503 = vadd.f32 %v2502, %v2223
  %v2504 = vadd.f32 %v2503, %v2224
  %v2505 = vadd.f32 %v2504, %v2225
  %v2506 = vadd.f32 %v2505, %v2226
  %v2507 = vadd.f32 %v2506, %v2227
  %v2508 = vadd.f32 %v2507, %v2228
  %v2509 = vadd.f32 %v2508, %v2229
  %v2510 = vadd.f32 %v2509, %v2230
  %v2511 = vadd.f32 %v2510, %v2231
  %v2512 = vadd.f32 %v2511, %v2232
  %v2513 = vadd.f32 %v2512, %v2233
  %v2514 = vadd.f32 %v2513, %v2234
  %v2515 = vadd.f32 %v2514, %v2235
  %v2516 = vadd.f32 %v2515, %v2236
  %v2517 = vadd.f32 %v2516, %v2237
  %v2518 = vadd.f32 %v2517, %v2238
  %v2519 = vadd.f32 %v2518, %v2239
  %v2520 = vadd.f32 %v2519, %v2240
  %v2521 = vadd.f32 %v2520, %v2241
  %v2522 = vrot.slane %v2521, 4
  %v2523 = vadd.f32 %v2521, %v2522
  %v2524 = vrot.slane %v2523, 2
  %v2525 = vadd.f32 %v2523, %v2524
  %v2526 = vrot.slane %v2525, 1
  %v2527 = vadd.f32 %v2525, %v2526
  %v2528 = vadd.f32 %v2242, %v2243
  %v2529 = vadd.f32 %v2528, %v2244
  %v2530 = vadd.f32 %v2529, %v2245
  %v2531 = vadd.f32 %v2530, %v2246
  %v2532 = vadd.f32 %v2531, %v2247
  %v2533 = vadd.f32 %v2532, %v2248
  %v2534 = vadd.f32 %v2533, %v2249
  %v2535 = vadd.f32 %v2534, %v2250
  %v2536 = vadd.f32 %v2535, %v2251
  %v2537 = vadd.f32 %v2536, %v2252
  %v2538 = vadd.f32 %v2537, %v2253
  %v2539 = vadd.f32 %v2538, %v2254
  %v2540 = vadd.f32 %v2539, %v2255
  %v2541 = vadd.f32 %v2540, %v2256
  %v2542 = vadd.f32 %v2541, %v2257
  %v2543 = vadd.f32 %v2542, %v2258
  %v2544 = vadd.f32 %v2543, %v2259
  %v2545 = vadd.f32 %v2544, %v2260
  %v2546 = vadd.f32 %v2545, %v2261
  %v2547 = vadd.f32 %v2546, %v2262
  %v2548 = vadd.f32 %v2547, %v2263
  %v2549 = vadd.f32 %v2548, %v2264
  %v2550 = vadd.f32 %v2549, %v2265
  %v2551 = vadd.f32 %v2550, %v2266
  %v2552 = vadd.f32 %v2551, %v2267
  %v2553 = vadd.f32 %v2552, %v2268
  %v2554 = vadd.f32 %v2553, %v2269
  %v2555 = vadd.f32 %v2554, %v2270
  %v2556 = vadd.f32 %v2555, %v2271
  %v2557 = vadd.f32 %v2556, %v2272
  %v2558 = vadd.f32 %v2557, %v2273
  %v2559 = vrot.slane %v2558, 4
  %v2560 = vadd.f32 %v2558, %v2559
  %v2561 = vrot.slane %v2560, 2
  %v2562 = vadd.f32 %v2560, %v2561
  %v2563 = vrot.slane %v2562, 1
  %v2564 = vadd.f32 %v2562, %v2563
  %v2565 = vadd.f32 %v2274, %v2275
  %v2566 = vadd.f32 %v2565, %v2276
  %v2567 = vadd.f32 %v2566, %v2277
  %v2568 = vadd.f32 %v2567, %v2278
  %v2569 = vadd.f32 %v2568, %v2279
  %v2570 = vadd.f32 %v2569, %v2280
  %v2571 = vadd.f32 %v2570, %v2281
  %v2572 = vadd.f32 %v2571, %v2282
  %v2573 = vadd.f32 %v2572, %v2283
  %v2574 = vadd.f32 %v2573, %v2284
  %v2575 = vadd.f32 %v2574, %v2285
  %v2576 = vadd.f32 %v2575, %v2286
  %v2577 = vadd.f32 %v2576, %v2287
  %v2578 = vadd.f32 %v2577, %v2288
  %v2579 = vadd.f32 %v2578, %v2289
  %v2580 = vadd.f32 %v2579, %v2290
  %v2581 = vadd.f32 %v2580, %v2291
  %v2582 = vadd.f32 %v2581, %v2292
  %v2583 = vadd.f32 %v2582, %v2293
  %v2584 = vadd.f32 %v2583, %v2294
  %v2585 = vadd.f32 %v2584, %v2295
  %v2586 = vadd.f32 %v2585, %v2296
  %v2587 = vadd.f32 %v2586, %v2297
  %v2588 = vadd.f32 %v2587, %v2298
  %v2589 = vadd.f32 %v2588, %v2299
  %v2590 = vadd.f32 %v2589, %v2300
  %v2591 = vadd.f32 %v2590, %v2301
  %v2592 = vadd.f32 %v2591, %v2302
  %v2593 = vadd.f32 %v2592, %v2303
  %v2594 = vadd.f32 %v2593, %v2304
  %v2595 = vadd.f32 %v2594, %v2305
  %v2596 = vrot.slane %v2595, 4
  %v2597 = vadd.f32 %v2595, %v2596
  %v2598 = vrot.slane %v2597, 2
  %v2599 = vadd.f32 %v2597, %v2598
  %v2600 = vrot.slane %v2599, 1
  %v2601 = vadd.f32 %v2599, %v2600
  %v2602 = vrcp.pop 256.0
  %v2603 = vmul.f32 %v2342, %v2602
  %v2604 = vmul.f32 %v2379, %v2602
  %v2605 = vmul.f32 %v2416, %v2602
  %v2606 = vmul.f32 %v2453, %v2602
  %v2607 = vmul.f32 %v2490, %v2602
  %v2608 = vmul.f32 %v2527, %v2602
  %v2609 = vmul.f32 %v2564, %v2602
  %v2610 = vmul.f32 %v2601, %v2602
  %vm2619 = vcmask 1041409
  %v2620 = vsel %vm2619, %v2604, %v2603
  %vm2621 = vcmask 1042434
  %v2622 = vsel %vm2621, %v2605, %v2620
  %vm2623 = vcmask 1043459
  %v2624 = vsel %vm2623, %v2606, %v2622
  %vm2625 = vcmask 1044484
  %v2626 = vsel %vm2625, %v2607, %v2624
  %vm2627 = vcmask 1045509
  %v2628 = vsel %vm2627, %v2608, %v2626
  %vm2629 = vcmask 1046534
  %v2630 = vsel %vm2629, %v2609, %v2628
  %vm2631 = vcmask 1047559
  %v2632 = vsel %vm2631, %v2610, %v2630
  %2634 = vst [vmem:[%s5] sm:$0xff] %v2632
  %v2635 = vld [vmem:[%s2] sm:$0xf]
  %v2636 = vld [vmem:[%s2 + $0x4] sm:$0xf]
  %v2637 = vld [vmem:[%s2 + $0x8] sm:$0xf]
  %v2638 = vld [vmem:[%s2 + $0xc] sm:$0xf]
  %v2639 = vld [vmem:[%s2 + $0x10] sm:$0xf]
  %v2640 = vld [vmem:[%s2 + $0x14] sm:$0xf]
  %v2641 = vld [vmem:[%s2 + $0x18] sm:$0xf]
  %v2642 = vld [vmem:[%s2 + $0x1c] sm:$0xf]
  %v2643 = vld [vmem:[%s2 + $0x20] sm:$0xf]
  %v2644 = vld [vmem:[%s2 + $0x24] sm:$0xf]
  %v2645 = vld [vmem:[%s2 + $0x28] sm:$0xf]
  %v2646 = vld [vmem:[%s2 + $0x2c] sm:$0xf]
  %v2647 = vld [vmem:[%s2 + $0x30] sm:$0xf]
  %v2648 = vld [vmem:[%s2 + $0x34] sm:$0xf]
  %v2649 = vld [vmem:[%s2 + $0x38] sm:$0xf]
  %v2650 = vld [vmem:[%s2 + $0x3c] sm:$0xf]
  %v2651 = vunpack.c.l.bf16 %v2635
  %v2652 = vunpack.c.l.bf16 %v2636
  %v2653 = vunpack.c.l.bf16 %v2637
  %v2654 = vunpack.c.l.bf16 %v2638
  %v2655 = vunpack.c.l.bf16 %v2639
  %v2656 = vunpack.c.l.bf16 %v2640
  %v2657 = vunpack.c.l.bf16 %v2641
  %v2658 = vunpack.c.l.bf16 %v2642
  %v2659 = vunpack.c.l.bf16 %v2643
  %v2660 = vunpack.c.l.bf16 %v2644
  %v2661 = vunpack.c.l.bf16 %v2645
  %v2662 = vunpack.c.l.bf16 %v2646
  %v2663 = vunpack.c.l.bf16 %v2647
  %v2664 = vunpack.c.l.bf16 %v2648
  %v2665 = vunpack.c.l.bf16 %v2649
  %v2666 = vunpack.c.l.bf16 %v2650
  %v2667 = vld [vmem:[%s3] sm:$0x1]
  %v2669 = vlaneseq
  %v2670 = vshrl.u32 %v2669, 7
  %v2671 = vsub.s32 0, %v2670
  %v2672 = vrot.slane %v2667, %v2671
  %2674 = vmatprep.subr.mxu0 0.0
  %2675 = vmatpush1.msra.mxu0 %v2651
  %2676 = vmatprep.subr.mxu0 0.0
  %2677 = vmatpush1.msra.mxu0 %v2652
  %2678 = vmatprep.subr.mxu0 0.0
  %2679 = vmatpush1.msra.mxu0 %v2653
  %2680 = vmatprep.subr.mxu0 0.0
  %2681 = vmatpush1.msra.mxu0 %v2654
  %2682 = vmatprep.subr.mxu0 0.0
  %2683 = vmatpush1.msra.mxu0 %v2655
  %2684 = vmatprep.subr.mxu0 0.0
  %2685 = vmatpush1.msra.mxu0 %v2656
  %2686 = vmatprep.subr.mxu0 0.0
  %2687 = vmatpush1.msra.mxu0 %v2657
  %2688 = vmatprep.subr.mxu0 0.0
  %2689 = vmatpush1.msra.mxu0 %v2658
  %2690 = vmatprep.subr.mxu0 0.0
  %2691 = vmatpush1.msra.mxu0 %v2659
  %2692 = vmatprep.subr.mxu0 0.0
  %2693 = vmatpush1.msra.mxu0 %v2660
  %2694 = vmatprep.subr.mxu0 0.0
  %2695 = vmatpush1.msra.mxu0 %v2661
  %2696 = vmatprep.subr.mxu0 0.0
  %2697 = vmatpush1.msra.mxu0 %v2662
  %2698 = vmatprep.subr.mxu0 0.0
  %2699 = vmatpush1.msra.mxu0 %v2663
  %2700 = vmatprep.subr.mxu0 0.0
  %2701 = vmatpush1.msra.mxu0 %v2664
  %2702 = vmatprep.subr.mxu0 0.0
  %2703 = vmatpush1.msra.mxu0 %v2665
  %2704 = vmatprep.subr.mxu0 0.0
  %2705 = vmatpush1.msra.mxu0 %v2666
  %2706 = vmatprep.subr.mxu0 0.0
  %2707 = vmatpush1.msra.mxu0 0.0
  %2708 = vmatprep.subr.mxu0 0.0
  %2709 = vmatpush1.msra.mxu0 0.0
  %2710 = vmatprep.subr.mxu0 0.0
  %2711 = vmatpush1.msra.mxu0 0.0
  %2712 = vmatprep.subr.mxu0 0.0
  %2713 = vmatpush1.msra.mxu0 0.0
  %2714 = vmatprep.subr.mxu0 0.0
  %2715 = vmatpush1.msra.mxu0 0.0
  %2716 = vmatprep.subr.mxu0 0.0
  %2717 = vmatpush1.msra.mxu0 0.0
  %2718 = vmatprep.subr.mxu0 0.0
  %2719 = vmatpush1.msra.mxu0 0.0
  %2720 = vmatprep.subr.mxu0 0.0
  %2721 = vmatpush1.msra.mxu0 0.0
  %2722 = vmatprep.subr.mxu0 0.0
  %2723 = vmatpush1.msra.mxu0 0.0
  %2724 = vmatprep.subr.mxu0 0.0
  %2725 = vmatpush1.msra.mxu0 0.0
  %2726 = vmatprep.subr.mxu0 0.0
  %2727 = vmatpush1.msra.mxu0 0.0
  %2728 = vmatprep.subr.mxu0 0.0
  %2729 = vmatpush1.msra.mxu0 0.0
  %2730 = vmatprep.subr.mxu0 0.0
  %2731 = vmatpush1.msra.mxu0 0.0
  %2732 = vmatprep.subr.mxu0 0.0
  %2733 = vmatpush1.msra.mxu0 0.0
  %2734 = vmatprep.subr.mxu0 0.0
  %2735 = vmatpush1.msra.mxu0 0.0
  %2736 = vmatprep.subr.mxu0 0.0
  %2737 = vmatpush1.msra.mxu0 0.0
  %2738 = vmatprep.mubr.f32.mxu0 0.0
  %2739 = vmatmul.mubr.f32.gmra.mrb[0].mxu0 %v2632
  %v2740 = vpop.f32.mrb[0].mxu0
  %v2741 = vadd.f32 %v2672, %v2740
  %v2742 = vpop.f32.mrb[0].mxu0
  %2743 = vdwg.mxu0
  %2744 = vst [vmem:[%s4] sm:$0xff] %v2741
  // Predicated region
  $region18: #{classifier_base_forward.1} parent=0 // pred_check
    _
  $region19: #{classifier_base_forward.1} parent=0 // pred_check_branch
    %2746 = sbr.rel (0) target = $region21
  $region20: #{classifier_base_forward.1} parent=0 // pred_region
    _
  $region21: #{classifier_base_forward.1} parent=0 // pred_fallthru
    _
  // Predicated region
  $region22: #{classifier_base_forward.1} parent=0 // pred_check
    _
  $region23: #{classifier_base_forward.1} parent=0 // pred_check_branch
    %2748 = sbr.rel (0) target = $region25
  $region24: #{classifier_base_forward.1} parent=0 // pred_region
    _
  $region25: #{classifier_base_forward.1} parent=0 // pred_fallthru
    _
  // Predicated region
  $region26: #{classifier_base_forward.1} parent=0 // pred_check
    _
  $region27: #{classifier_base_forward.1} parent=0 // pred_check_branch
    %2750 = sbr.rel (0) target = $region29
  $region28: #{classifier_base_forward.1} parent=0 // pred_region
    _
  $region29: #{classifier_base_forward.1} parent=0 // pred_fallthru
    _
  // Predicated region
  $region30: #{classifier_base_forward.1} parent=0 // pred_check
    _
  $region31: #{classifier_base_forward.1} parent=0 // pred_check_branch
    %2752 = sbr.rel (0) target = $region33
  $region32: #{classifier_base_forward.1} parent=0 // pred_region
    _
  $region33: #{classifier_base_forward.1} parent=0 // pred_fallthru
    _

</llo_original>
